<compile_context>
chip_gen: v7x
topology: tpu7x:2x2x1
jax: 0.10.0
libtpu: 0.0.40
codegen_flags: <defaults>
</compile_context>

<pallas_src>
import functools

import jax
import jax.numpy as jnp
from jax.experimental import pallas as pl
from jax.experimental.pallas import tpu as pltpu

LN_EPS = 1e-5  # PyTorch nn.LayerNorm default
LANE = 128

# Row layout of the packed "small parameters" buffer (f32, (16, max_dim)).
ROW_LN0_G, ROW_LN0_B = 0, 1
ROW_B0, ROW_B1 = 2, 3
ROW_LN1_G, ROW_LN1_B = 4, 5
ROW_B2 = 6
ROW_LN2_G, ROW_LN2_B = 7, 8
ROW_B3 = 9
ROW_MASK_NAIL, ROW_MASK_HID = 10, 11
N_SMALL_ROWS = 16  # padded to a multiple of 8 sublanes


def _round_up(n, m):
    return ((n + m - 1) // m) * m


# ---------------------------------------------------------------------------
# One-time hardware / capability probes (import time, not per call).
# ---------------------------------------------------------------------------
def _tpu_hw_info():
    kind = ""
    try:
        kind = jax.devices()[0].device_kind.lower()
    except Exception:
        pass
    vmem_cap = None
    try:
        vmem_cap = int(pltpu.get_tpu_info().vmem_capacity_bytes)
    except Exception:
        vmem_cap = None
    if not vmem_cap or vmem_cap <= 0:
        if "v7" in kind:
            vmem_cap = 64 << 20
        elif kind:
            vmem_cap = 128 << 20
        else:
            vmem_cap = 64 << 20  # unknown: be conservative
    # TensorCores a "parallel" grid axis can shard over (megacore / dual-TC).
    num_tc = 2 if any(t in kind for t in ("v4", "v5p", "v7")) else 1
    return vmem_cap, num_tc


def _probe_single_buffer_params():
    """Check once whether pipeline_mode=pl.Buffered(1) lowers+compiles."""
    buffered = getattr(pl, "Buffered", None)
    if buffered is None:
        return False
    try:
        def _k(x_ref, o_ref):
            o_ref[...] = x_ref[...] * 2.0

        fn = pl.pallas_call(
            _k,
            out_shape=jax.ShapeDtypeStruct((16, 128), jnp.float32),
            grid_spec=pltpu.PrefetchScalarGridSpec(
                num_scalar_prefetch=0,
                grid=(2,),
                in_specs=[pl.BlockSpec((8, 128), lambda i: (0, 0),
                                       pipeline_mode=buffered(1))],
                out_specs=pl.BlockSpec((8, 128), lambda i: (i, 0)),
            ),
        )
        jax.jit(fn).lower(
            jax.ShapeDtypeStruct((8, 128), jnp.float32)).compile()
        return True
    except Exception:
        return False


_VMEM_CAP, _NUM_TC = _tpu_hw_info()
_SINGLE_BUFFER_PARAMS = _probe_single_buffer_params()


def _choose_batch_tile(batch, num_tc):
    """Generation-aware batch tile: 1 step on single-TC parts, even split on 2-TC."""
    b_min = _round_up(max(batch, 8), 8)
    if num_tc <= 1:
        tile = min(b_min, 512)                          # one step for small batches
    else:
        tile = min(_round_up(pl.cdiv(b_min, num_tc), 8), 256)
    return max(8, _round_up(tile, 8))


# ---------------------------------------------------------------------------
# Kernel
# ---------------------------------------------------------------------------
def mlp_skipper_kernel(x_ref, small_ref, w0_ref, w1_ref, w2_ref, w3_ref, o_ref,
                       *, nail, hidden, nail_p, hid_p, ham_p):
    # Invariant (established by prepare_params / x padding): all padded lanes of
    # the input activations, weights, biases and LN gamma/beta are exactly zero,
    # so activations keep zero padded lanes through the whole network and only
    # the (x - mu) term inside LayerNorm needs masking.
    def row(r, d):
        return small_ref[r:r + 1, :d]

    def mm(a_f32, w_ref):
        # MXU path: bf16 operands, f32 accumulation.
        return jnp.dot(a_f32.astype(jnp.bfloat16), w_ref[...],
                       preferred_element_type=jnp.float32)

    def layernorm(v, gamma, beta, true_d, mask):
        inv_d = 1.0 / float(true_d)
        mu = jnp.sum(v, axis=-1, keepdims=True) * inv_d
        diff = v - mu
        if mask is not None:
            diff = diff * mask       # re-zero padded lanes (they became -mu)
        var = jnp.sum(diff * diff, axis=-1, keepdims=True) * inv_d
        return diff * jax.lax.rsqrt(var + LN_EPS) * gamma + beta

    # Precomputed lane masks (rows of the packed buffer); skipped when unpadded.
    mask_nail = row(ROW_MASK_NAIL, nail_p) if nail_p != nail else None
    mask_hid = row(ROW_MASK_HID, hid_p) if hid_p != hidden else None

    x = x_ref[...].astype(jnp.float32)

    # lns[0]
    x = layernorm(x, row(ROW_LN0_G, nail_p), row(ROW_LN0_B, nail_p),
                  nail, mask_nail)
    # layers[0]: Linear(nail->hid) -> ReLU -> Linear(hid->hid)
    x = jnp.maximum(mm(x, w0_ref) + row(ROW_B0, hid_p), 0.0)
    x = mm(x, w1_ref) + row(ROW_B1, hid_p)
    # lns[1]
    x = layernorm(x, row(ROW_LN1_G, hid_p), row(ROW_LN1_B, hid_p),
                  hidden, mask_hid)
    # layers[1]: ReLU -> Linear(hid->hid), residual add
    y = mm(jnp.maximum(x, 0.0), w2_ref) + row(ROW_B2, hid_p)
    x = x + y
    # lns[2]
    x = layernorm(x, row(ROW_LN2_G, hid_p), row(ROW_LN2_B, hid_p),
                  hidden, mask_hid)
    # layers[2]: ReLU -> Linear(hid->hammer)
    x = mm(jnp.maximum(x, 0.0), w3_ref) + row(ROW_B3, ham_p)

    o_ref[...] = x.astype(o_ref.dtype)


# ---------------------------------------------------------------------------
# One-time parameter preparation (padding, bf16 cast, packing).
# ---------------------------------------------------------------------------
def prepare_params(params, nail, hidden, hammer):
    """Pad/cast/pack parameters once. Returns a dict reusable across calls."""
    nail_p = _round_up(nail, LANE)
    hid_p = _round_up(hidden, LANE)
    ham_p = _round_up(hammer, LANE)
    max_p = max(nail_p, hid_p, ham_p)

    def pad_w(w, rows, cols):
        w = jnp.asarray(w, jnp.float32)
        w = jnp.pad(w, ((0, rows - w.shape[0]), (0, cols - w.shape[1])))
        return w.astype(jnp.bfloat16)

    small = jnp.zeros((N_SMALL_ROWS, max_p), jnp.float32)

    def put(buf, r, vec):
        v = jnp.asarray(vec, jnp.float32).reshape(-1)
        return buf.at[r, : v.shape[0]].set(v)

    small = put(small, ROW_LN0_G, params["ln0_g"])
    small = put(small, ROW_LN0_B, params["ln0_b"])
    small = put(small, ROW_B0, params["b0"])
    small = put(small, ROW_B1, params["b1"])
    small = put(small, ROW_LN1_G, params["ln1_g"])
    small = put(small, ROW_LN1_B, params["ln1_b"])
    small = put(small, ROW_B2, params["b2"])
    small = put(small, ROW_LN2_G, params["ln2_g"])
    small = put(small, ROW_LN2_B, params["ln2_b"])
    small = put(small, ROW_B3, params["b3"])
    small = small.at[ROW_MASK_NAIL, :].set(
        (jnp.arange(max_p) < nail).astype(jnp.float32))
    small = small.at[ROW_MASK_HID, :].set(
        (jnp.arange(max_p) < hidden).astype(jnp.float32))

    arrays = {
        "w0": pad_w(params["w0"], nail_p, hid_p),
        "w1": pad_w(params["w1"], hid_p, hid_p),
        "w2": pad_w(params["w2"], hid_p, hid_p),
        "w3": pad_w(params["w3"], hid_p, ham_p),
        "small": small,
    }
    return {"arrays": arrays, "dims": (nail, hidden, hammer)}


# ---------------------------------------------------------------------------
# pallas_call wrapper
# ---------------------------------------------------------------------------
@functools.partial(jax.jit,
                   static_argnames=("nail", "hidden", "hammer", "batch_tile"))
def _mlp_skipper_impl(x, arrays, *, nail, hidden, hammer, batch_tile):
    B = x.shape[0]
    w0, w1, w2, w3 = arrays["w0"], arrays["w1"], arrays["w2"], arrays["w3"]
    small = arrays["small"]
    nail_p, hid_p = w0.shape
    ham_p = w3.shape[1]
    max_p = small.shape[1]

    b_p = _round_up(max(B, batch_tile), batch_tile)
    x_p = jnp.pad(x, ((0, b_p - B), (0, nail_p - nail)))
    grid = (b_p // batch_tile,)

    # --- VMEM budget (generation-aware; no big fixed floor) ----------------
    param_bytes = ((nail_p * hid_p + 2 * hid_p * hid_p + hid_p * ham_p) * 2
                   + N_SMALL_ROWS * max_p * 4)
    param_vmem = param_bytes if _SINGLE_BUFFER_PARAMS else 2 * param_bytes
    act_bytes = 2 * batch_tile * (nail_p + ham_p) * 4       # in/out, double-buffered
    interm_bytes = 6 * batch_tile * hid_p * 4                # f32 temporaries
    vmem_need = act_bytes + param_vmem + interm_bytes
    ceiling = max((3 * _VMEM_CAP) // 4, 16 << 20)            # ~48 MiB v7x, ~96 MiB v5e/v6e
    if vmem_need > ceiling:
        # TODO(synk): add a hidden-dim tiled fallback (grid over K/N with an f32
        # accumulator scratch + pl.when init/finalize) for very large hidden sizes.
        raise ValueError(
            f"MLPSkipper kernel needs ~{vmem_need >> 20} MiB of resident VMEM "
            f"but only ~{ceiling >> 20} MiB is available on this chip; "
            "reduce hidden_size or add a tiled weight path.")
    vmem_limit = int(min(max(vmem_need * 3 // 2 + (1 << 20), 8 << 20), ceiling))

    # --- specs --------------------------------------------------------------
    def act_spec(d):
        return pl.BlockSpec((batch_tile, d), lambda i: (i, 0))

    def const_spec(shape):
        idx = lambda i: (0,) * len(shape)
        if _SINGLE_BUFFER_PARAMS:
            return pl.BlockSpec(shape, idx, pipeline_mode=pl.Buffered(1))
        return pl.BlockSpec(shape, idx)

    in_specs = [
        act_spec(nail_p),                       # x
        const_spec((N_SMALL_ROWS, max_p)),      # packed biases / LN params / masks
        const_spec((nail_p, hid_p)),            # w0
        const_spec((hid_p, hid_p)),             # w1
        const_spec((hid_p, hid_p)),             # w2
        const_spec((hid_p, ham_p)),             # w3
    ]

    flops = 2 * b_p * (nail_p * hid_p + 2 * hid_p * hid_p + hid_p * ham_p)
    bytes_accessed = (x_p.size + b_p * ham_p) * 4 + param_bytes
    cost = pl.CostEstimate(flops=int(flops),
                           transcendentals=int(3 * b_p),
                           bytes_accessed=int(bytes_accessed))

    kernel = functools.partial(mlp_skipper_kernel, nail=nail, hidden=hidden,
                               nail_p=nail_p, hid_p=hid_p, ham_p=ham_p)

    out = pl.pallas_call(
        kernel,
        out_shape=jax.ShapeDtypeStruct((b_p, ham_p), x.dtype),
        grid_spec=pltpu.PrefetchScalarGridSpec(
            num_scalar_prefetch=0,
            grid=grid,
            in_specs=in_specs,
            out_specs=act_spec(ham_p),
        ),
        compiler_params=pltpu.CompilerParams(
            dimension_semantics=("parallel",),
            vmem_limit_bytes=vmem_limit,
        ),
        cost_estimate=cost,
    )(x_p, small, w0, w1, w2, w3)

    return out[:B, :hammer]


def mlp_skipper_pallas(x, prepared, *, batch_tile=None):
    """Run the fused MLPSkipper forward. `prepared` comes from prepare_params()."""
    nail, hidden, hammer = prepared["dims"]
    if batch_tile is None:
        batch_tile = _choose_batch_tile(x.shape[0], _NUM_TC)
    return _mlp_skipper_impl(x, prepared["arrays"], nail=nail, hidden=hidden,
                             hammer=hammer, batch_tile=batch_tile)


# ---------------------------------------------------------------------------
# Reference (pure JAX) + synthetic init for the self-test
# ---------------------------------------------------------------------------
def init_params(key, nail, hidden, hammer):
    ks = jax.random.split(key, 4)

    def linear(k, fan_in, fan_out):
        bound = 1.0 / jnp.sqrt(fan_in)
        kw, kb = jax.random.split(k)
        w = jax.random.uniform(kw, (fan_in, fan_out), jnp.float32, -bound, bound)
        b = jax.random.uniform(kb, (1, fan_out), jnp.float32, -bound, bound)
        return w, b

    w0, b0 = linear(ks[0], nail, hidden)
    w1, b1 = linear(ks[1], hidden, hidden)
    w2, b2 = linear(ks[2], hidden, hidden)
    w3, b3 = linear(ks[3], hidden, hammer)
    return {
        "ln0_g": jnp.ones((1, nail), jnp.float32),
        "ln0_b": jnp.zeros((1, nail), jnp.float32),
        "ln1_g": jnp.ones((1, hidden), jnp.float32),
        "ln1_b": jnp.zeros((1, hidden), jnp.float32),
        "ln2_g": jnp.ones((1, hidden), jnp.float32),
        "ln2_b": jnp.zeros((1, hidden), jnp.float32),
        "w0": w0, "b0": b0, "w1": w1, "b1": b1,
        "w2": w2, "b2": b2, "w3": w3, "b3": b3,
    }


def _layernorm_ref(x, gamma, beta):
    mu = jnp.mean(x, axis=-1, keepdims=True)
    var = jnp.mean((x - mu) * (x - mu), axis=-1, keepdims=True)
    return (x - mu) * jax.lax.rsqrt(var + LN_EPS) * gamma + beta


def mlp_skipper_ref(x, p, *, matmul_dtype=jnp.float32):
    # matmul_dtype=jnp.bfloat16 mirrors the kernel's MXU path (bf16 operands,
    # f32 accumulation) for a tight correctness check.
    def mm(a, w):
        return jnp.dot(a.astype(matmul_dtype), w.astype(matmul_dtype),
                       preferred_element_type=jnp.float32)

    x = _layernorm_ref(x, p["ln0_g"], p["ln0_b"])
    x = mm(x, p["w0"]) + p["b0"]
    x = jnp.maximum(x, 0.0)
    x = mm(x, p["w1"]) + p["b1"]
    x = _layernorm_ref(x, p["ln1_g"], p["ln1_b"])
    y = mm(jnp.maximum(x, 0.0), p["w2"]) + p["b2"]
    x = x + y
    x = _layernorm_ref(x, p["ln2_g"], p["ln2_b"])
    return mm(jnp.maximum(x, 0.0), p["w3"]) + p["b3"]


if __name__ == "__main__":
    nail_size, hidden_size, hammer_size = 16, 32, 8
    batch = 256

    key = jax.random.PRNGKey(0)
    kx, kp = jax.random.split(key)
    x = jax.random.normal(kx, (batch, nail_size), jnp.float32)
    params = init_params(kp, nail_size, hidden_size, hammer_size)

    # One-time parameter padding / bf16 cast / packing (hoisted out of the call path).
    prep = prepare_params(params, nail_size, hidden_size, hammer_size)

    out = jax.block_until_ready(mlp_skipper_pallas(x, prep))
    assert out.shape == (batch, hammer_size)

    # Tight check vs. a reference using the same bf16 matmul inputs.
    ref_bf16 = mlp_skipper_ref(x, params, matmul_dtype=jnp.bfloat16)
    err = float(jnp.max(jnp.abs(out - ref_bf16)))
    assert jnp.allclose(out, ref_bf16, atol=2e-3, rtol=2e-3), err
    # Loose sanity check vs. the pure-f32 reference (bf16 matmul rounding).
    ref_f32 = mlp_skipper_ref(x, params)
    assert jnp.allclose(out, ref_f32, atol=5e-2, rtol=5e-2), float(
        jnp.max(jnp.abs(out - ref_f32)))

    # Second call reuses prepared params and the compiled kernel (no re-padding).
    out2 = jax.block_until_ready(mlp_skipper_pallas(x, prep))
    assert jnp.array_equal(out, out2)

    print("KERNEL_OK")
</pallas_src>

<mosaic_0001>
module attributes {stable_mosaic.version = 11 : i64} {
  func.func @mlp_skipper_kernel(%arg0: i32, %arg1: memref<256x128xf32, #tpu.memory_space<vmem>>, %arg2: memref<16x128xf32, #tpu.memory_space<vmem>>, %arg3: memref<128x128xbf16, #tpu.memory_space<vmem>>, %arg4: memref<128x128xbf16, #tpu.memory_space<vmem>>, %arg5: memref<128x128xbf16, #tpu.memory_space<vmem>>, %arg6: memref<128x128xbf16, #tpu.memory_space<vmem>>, %arg7: memref<256x128xf32, #tpu.memory_space<vmem>>) attributes {dimension_semantics = [#tpu.dimension_semantics<parallel>], iteration_bounds = array<i64: 1>, scalar_prefetch = 0 : i64, scratch_operands = 0 : i64, tpu.core_type = #tpu.core_type<tc>, window_params = [{transform_indices = @transform_0, window_bounds = array<i64: 256, 128>}, {pipeline_mode = #tpu.pipeline_mode<synchronous>, transform_indices = @transform_1, window_bounds = array<i64: 16, 128>}, {pipeline_mode = #tpu.pipeline_mode<synchronous>, transform_indices = @transform_2, window_bounds = array<i64: 128, 128>}, {pipeline_mode = #tpu.pipeline_mode<synchronous>, transform_indices = @transform_3, window_bounds = array<i64: 128, 128>}, {pipeline_mode = #tpu.pipeline_mode<synchronous>, transform_indices = @transform_4, window_bounds = array<i64: 128, 128>}, {pipeline_mode = #tpu.pipeline_mode<synchronous>, transform_indices = @transform_5, window_bounds = array<i64: 128, 128>}, {transform_indices = @transform_6, window_bounds = array<i64: 256, 128>}]} {
    %c10 = arith.constant 10 : index
    %c0 = arith.constant 0 : index
    %0 = vector.load %arg2[%c10, %c0] : memref<16x128xf32, #tpu.memory_space<vmem>>, vector<1x128xf32>
    %c11 = arith.constant 11 : index
    %c0_0 = arith.constant 0 : index
    %1 = vector.load %arg2[%c11, %c0_0] : memref<16x128xf32, #tpu.memory_space<vmem>>, vector<1x128xf32>
    %c0_1 = arith.constant 0 : index
    %c0_2 = arith.constant 0 : index
    %2 = vector.load %arg1[%c0_1, %c0_2] : memref<256x128xf32, #tpu.memory_space<vmem>>, vector<256x128xf32>
    %c0_3 = arith.constant 0 : index
    %c0_4 = arith.constant 0 : index
    %3 = vector.load %arg2[%c0_3, %c0_4] : memref<16x128xf32, #tpu.memory_space<vmem>>, vector<1x128xf32>
    %c1 = arith.constant 1 : index
    %c0_5 = arith.constant 0 : index
    %4 = vector.load %arg2[%c1, %c0_5] : memref<16x128xf32, #tpu.memory_space<vmem>>, vector<1x128xf32>
    %cst = arith.constant dense<0.000000e+00> : vector<256xf32>
    %5 = vector.multi_reduction <add>, %2, %cst [1] : vector<256x128xf32> to vector<256xf32>
    %6 = vector.shape_cast %5 : vector<256xf32> to vector<256x1xf32>
    %cst_6 = arith.constant 6.250000e-02 : f32
    %7 = vector.broadcast %cst_6 : f32 to vector<256x1xf32>
    %8 = arith.mulf %6, %7 : vector<256x1xf32>
    %9 = vector.broadcast %8 : vector<256x1xf32> to vector<256x128xf32>
    %10 = arith.subf %2, %9 : vector<256x128xf32>
    %11 = vector.broadcast %0 : vector<1x128xf32> to vector<256x128xf32>
    %12 = arith.mulf %10, %11 : vector<256x128xf32>
    %13 = arith.mulf %12, %12 : vector<256x128xf32>
    %cst_7 = arith.constant dense<0.000000e+00> : vector<256xf32>
    %14 = vector.multi_reduction <add>, %13, %cst_7 [1] : vector<256x128xf32> to vector<256xf32>
    %15 = vector.shape_cast %14 : vector<256xf32> to vector<256x1xf32>
    %cst_8 = arith.constant 6.250000e-02 : f32
    %16 = vector.broadcast %cst_8 : f32 to vector<256x1xf32>
    %17 = arith.mulf %15, %16 : vector<256x1xf32>
    %cst_9 = arith.constant 9.99999974E-6 : f32
    %18 = vector.broadcast %cst_9 : f32 to vector<256x1xf32>
    %19 = arith.addf %17, %18 : vector<256x1xf32>
    %20 = math.rsqrt %19 : vector<256x1xf32>
    %21 = vector.broadcast %20 : vector<256x1xf32> to vector<256x128xf32>
    %22 = arith.mulf %12, %21 : vector<256x128xf32>
    %23 = vector.broadcast %3 : vector<1x128xf32> to vector<256x128xf32>
    %24 = arith.mulf %22, %23 : vector<256x128xf32>
    %25 = vector.broadcast %4 : vector<1x128xf32> to vector<256x128xf32>
    %26 = arith.addf %24, %25 : vector<256x128xf32>
    %27 = arith.truncf %26 : vector<256x128xf32> to vector<256x128xbf16>
    %c0_10 = arith.constant 0 : index
    %c0_11 = arith.constant 0 : index
    %28 = vector.load %arg3[%c0_10, %c0_11] : memref<128x128xbf16, #tpu.memory_space<vmem>>, vector<128x128xbf16>
    %cst_12 = arith.constant dense<0.000000e+00> : vector<256x128xf32>
    %29 = tpu.matmul %27, %28, %cst_12 {dimension_numbers = #tpu.dot_dimension_numbers<[1], [0], [0], [1], [0, 0, 1, 1], [], []>} : vector<256x128xbf16>, vector<128x128xbf16>, vector<256x128xf32> -> vector<256x128xf32>
    %c2 = arith.constant 2 : index
    %c0_13 = arith.constant 0 : index
    %30 = vector.load %arg2[%c2, %c0_13] : memref<16x128xf32, #tpu.memory_space<vmem>>, vector<1x128xf32>
    %31 = vector.broadcast %30 : vector<1x128xf32> to vector<256x128xf32>
    %32 = arith.addf %29, %31 : vector<256x128xf32>
    %cst_14 = arith.constant 0.000000e+00 : f32
    %33 = vector.broadcast %cst_14 : f32 to vector<256x128xf32>
    %34 = arith.maximumf %32, %33 : vector<256x128xf32>
    %35 = arith.truncf %34 : vector<256x128xf32> to vector<256x128xbf16>
    %c0_15 = arith.constant 0 : index
    %c0_16 = arith.constant 0 : index
    %36 = vector.load %arg4[%c0_15, %c0_16] : memref<128x128xbf16, #tpu.memory_space<vmem>>, vector<128x128xbf16>
    %cst_17 = arith.constant dense<0.000000e+00> : vector<256x128xf32>
    %37 = tpu.matmul %35, %36, %cst_17 {dimension_numbers = #tpu.dot_dimension_numbers<[1], [0], [0], [1], [0, 0, 1, 1], [], []>} : vector<256x128xbf16>, vector<128x128xbf16>, vector<256x128xf32> -> vector<256x128xf32>
    %c3 = arith.constant 3 : index
    %c0_18 = arith.constant 0 : index
    %38 = vector.load %arg2[%c3, %c0_18] : memref<16x128xf32, #tpu.memory_space<vmem>>, vector<1x128xf32>
    %39 = vector.broadcast %38 : vector<1x128xf32> to vector<256x128xf32>
    %40 = arith.addf %37, %39 : vector<256x128xf32>
    %c4 = arith.constant 4 : index
    %c0_19 = arith.constant 0 : index
    %41 = vector.load %arg2[%c4, %c0_19] : memref<16x128xf32, #tpu.memory_space<vmem>>, vector<1x128xf32>
    %c5 = arith.constant 5 : index
    %c0_20 = arith.constant 0 : index
    %42 = vector.load %arg2[%c5, %c0_20] : memref<16x128xf32, #tpu.memory_space<vmem>>, vector<1x128xf32>
    %cst_21 = arith.constant dense<0.000000e+00> : vector<256xf32>
    %43 = vector.multi_reduction <add>, %40, %cst_21 [1] : vector<256x128xf32> to vector<256xf32>
    %44 = vector.shape_cast %43 : vector<256xf32> to vector<256x1xf32>
    %cst_22 = arith.constant 3.125000e-02 : f32
    %45 = vector.broadcast %cst_22 : f32 to vector<256x1xf32>
    %46 = arith.mulf %44, %45 : vector<256x1xf32>
    %47 = vector.broadcast %46 : vector<256x1xf32> to vector<256x128xf32>
    %48 = arith.subf %40, %47 : vector<256x128xf32>
    %49 = vector.broadcast %1 : vector<1x128xf32> to vector<256x128xf32>
    %50 = arith.mulf %48, %49 : vector<256x128xf32>
    %51 = arith.mulf %50, %50 : vector<256x128xf32>
    %cst_23 = arith.constant dense<0.000000e+00> : vector<256xf32>
    %52 = vector.multi_reduction <add>, %51, %cst_23 [1] : vector<256x128xf32> to vector<256xf32>
    %53 = vector.shape_cast %52 : vector<256xf32> to vector<256x1xf32>
    %cst_24 = arith.constant 3.125000e-02 : f32
    %54 = vector.broadcast %cst_24 : f32 to vector<256x1xf32>
    %55 = arith.mulf %53, %54 : vector<256x1xf32>
    %cst_25 = arith.constant 9.99999974E-6 : f32
    %56 = vector.broadcast %cst_25 : f32 to vector<256x1xf32>
    %57 = arith.addf %55, %56 : vector<256x1xf32>
    %58 = math.rsqrt %57 : vector<256x1xf32>
    %59 = vector.broadcast %58 : vector<256x1xf32> to vector<256x128xf32>
    %60 = arith.mulf %50, %59 : vector<256x128xf32>
    %61 = vector.broadcast %41 : vector<1x128xf32> to vector<256x128xf32>
    %62 = arith.mulf %60, %61 : vector<256x128xf32>
    %63 = vector.broadcast %42 : vector<1x128xf32> to vector<256x128xf32>
    %64 = arith.addf %62, %63 : vector<256x128xf32>
    %cst_26 = arith.constant 0.000000e+00 : f32
    %65 = vector.broadcast %cst_26 : f32 to vector<256x128xf32>
    %66 = arith.maximumf %64, %65 : vector<256x128xf32>
    %67 = arith.truncf %66 : vector<256x128xf32> to vector<256x128xbf16>
    %c0_27 = arith.constant 0 : index
    %c0_28 = arith.constant 0 : index
    %68 = vector.load %arg5[%c0_27, %c0_28] : memref<128x128xbf16, #tpu.memory_space<vmem>>, vector<128x128xbf16>
    %cst_29 = arith.constant dense<0.000000e+00> : vector<256x128xf32>
    %69 = tpu.matmul %67, %68, %cst_29 {dimension_numbers = #tpu.dot_dimension_numbers<[1], [0], [0], [1], [0, 0, 1, 1], [], []>} : vector<256x128xbf16>, vector<128x128xbf16>, vector<256x128xf32> -> vector<256x128xf32>
    %c6 = arith.constant 6 : index
    %c0_30 = arith.constant 0 : index
    %70 = vector.load %arg2[%c6, %c0_30] : memref<16x128xf32, #tpu.memory_space<vmem>>, vector<1x128xf32>
    %71 = vector.broadcast %70 : vector<1x128xf32> to vector<256x128xf32>
    %72 = arith.addf %69, %71 : vector<256x128xf32>
    %73 = arith.addf %64, %72 : vector<256x128xf32>
    %c7 = arith.constant 7 : index
    %c0_31 = arith.constant 0 : index
    %74 = vector.load %arg2[%c7, %c0_31] : memref<16x128xf32, #tpu.memory_space<vmem>>, vector<1x128xf32>
    %c8 = arith.constant 8 : index
    %c0_32 = arith.constant 0 : index
    %75 = vector.load %arg2[%c8, %c0_32] : memref<16x128xf32, #tpu.memory_space<vmem>>, vector<1x128xf32>
    %cst_33 = arith.constant dense<0.000000e+00> : vector<256xf32>
    %76 = vector.multi_reduction <add>, %73, %cst_33 [1] : vector<256x128xf32> to vector<256xf32>
    %77 = vector.shape_cast %76 : vector<256xf32> to vector<256x1xf32>
    %cst_34 = arith.constant 3.125000e-02 : f32
    %78 = vector.broadcast %cst_34 : f32 to vector<256x1xf32>
    %79 = arith.mulf %77, %78 : vector<256x1xf32>
    %80 = vector.broadcast %79 : vector<256x1xf32> to vector<256x128xf32>
    %81 = arith.subf %73, %80 : vector<256x128xf32>
    %82 = vector.broadcast %1 : vector<1x128xf32> to vector<256x128xf32>
    %83 = arith.mulf %81, %82 : vector<256x128xf32>
    %84 = arith.mulf %83, %83 : vector<256x128xf32>
    %cst_35 = arith.constant dense<0.000000e+00> : vector<256xf32>
    %85 = vector.multi_reduction <add>, %84, %cst_35 [1] : vector<256x128xf32> to vector<256xf32>
    %86 = vector.shape_cast %85 : vector<256xf32> to vector<256x1xf32>
    %cst_36 = arith.constant 3.125000e-02 : f32
    %87 = vector.broadcast %cst_36 : f32 to vector<256x1xf32>
    %88 = arith.mulf %86, %87 : vector<256x1xf32>
    %cst_37 = arith.constant 9.99999974E-6 : f32
    %89 = vector.broadcast %cst_37 : f32 to vector<256x1xf32>
    %90 = arith.addf %88, %89 : vector<256x1xf32>
    %91 = math.rsqrt %90 : vector<256x1xf32>
    %92 = vector.broadcast %91 : vector<256x1xf32> to vector<256x128xf32>
    %93 = arith.mulf %83, %92 : vector<256x128xf32>
    %94 = vector.broadcast %74 : vector<1x128xf32> to vector<256x128xf32>
    %95 = arith.mulf %93, %94 : vector<256x128xf32>
    %96 = vector.broadcast %75 : vector<1x128xf32> to vector<256x128xf32>
    %97 = arith.addf %95, %96 : vector<256x128xf32>
    %cst_38 = arith.constant 0.000000e+00 : f32
    %98 = vector.broadcast %cst_38 : f32 to vector<256x128xf32>
    %99 = arith.maximumf %97, %98 : vector<256x128xf32>
    %100 = arith.truncf %99 : vector<256x128xf32> to vector<256x128xbf16>
    %c0_39 = arith.constant 0 : index
    %c0_40 = arith.constant 0 : index
    %101 = vector.load %arg6[%c0_39, %c0_40] : memref<128x128xbf16, #tpu.memory_space<vmem>>, vector<128x128xbf16>
    %cst_41 = arith.constant dense<0.000000e+00> : vector<256x128xf32>
    %102 = tpu.matmul %100, %101, %cst_41 {dimension_numbers = #tpu.dot_dimension_numbers<[1], [0], [0], [1], [0, 0, 1, 1], [], []>} : vector<256x128xbf16>, vector<128x128xbf16>, vector<256x128xf32> -> vector<256x128xf32>
    %c9 = arith.constant 9 : index
    %c0_42 = arith.constant 0 : index
    %103 = vector.load %arg2[%c9, %c0_42] : memref<16x128xf32, #tpu.memory_space<vmem>>, vector<1x128xf32>
    %104 = vector.broadcast %103 : vector<1x128xf32> to vector<256x128xf32>
    %105 = arith.addf %102, %104 : vector<256x128xf32>
    %c0_43 = arith.constant 0 : index
    %c0_44 = arith.constant 0 : index
    %106 = vector.load %arg7[%c0_43, %c0_44] : memref<256x128xf32, #tpu.memory_space<vmem>>, vector<256x128xf32>
    tpu.vector_store %arg7[%c0_43, %c0_44], %105 {strides = array<i32>} : memref<256x128xf32, #tpu.memory_space<vmem>>, vector<256x128xf32>,
    return
  }
  func.func @transform_0(%arg0: i32) -> (i32, i32) {
    %c0_i32 = arith.constant 0 : i32
    %c0_i32_0 = arith.constant 0 : i32
    return %arg0, %c0_i32 : i32, i32
  }
  func.func @transform_1(%arg0: i32) -> (i32, i32) {
    %c0_i32 = arith.constant 0 : i32
    %c0_i32_0 = arith.constant 0 : i32
    %c0_i32_1 = arith.constant 0 : i32
    return %c0_i32, %c0_i32_0 : i32, i32
  }
  func.func @transform_2(%arg0: i32) -> (i32, i32) {
    %c0_i32 = arith.constant 0 : i32
    %c0_i32_0 = arith.constant 0 : i32
    %c0_i32_1 = arith.constant 0 : i32
    return %c0_i32, %c0_i32_0 : i32, i32
  }
  func.func @transform_3(%arg0: i32) -> (i32, i32) {
    %c0_i32 = arith.constant 0 : i32
    %c0_i32_0 = arith.constant 0 : i32
    %c0_i32_1 = arith.constant 0 : i32
    return %c0_i32, %c0_i32_0 : i32, i32
  }
  func.func @transform_4(%arg0: i32) -> (i32, i32) {
    %c0_i32 = arith.constant 0 : i32
    %c0_i32_0 = arith.constant 0 : i32
    %c0_i32_1 = arith.constant 0 : i32
    return %c0_i32, %c0_i32_0 : i32, i32
  }
  func.func @transform_5(%arg0: i32) -> (i32, i32) {
    %c0_i32 = arith.constant 0 : i32
    %c0_i32_0 = arith.constant 0 : i32
    %c0_i32_1 = arith.constant 0 : i32
    return %c0_i32, %c0_i32_0 : i32, i32
  }
  func.func @transform_6(%arg0: i32) -> (i32, i32) {
    %c0_i32 = arith.constant 0 : i32
    %c0_i32_0 = arith.constant 0 : i32
    return %arg0, %c0_i32 : i32, i32
  }
}

</mosaic_0001>

<llo_original>
// kernel: _mlp_skipper_impl.1
$region0: #{_mlp_skipper_impl.1}
  #allocation0 [shape = 'u32[]', space=smem, size = 0x4, offset = 0x4, fixed_abs, tag = 'smem constant byte address 0x4 - core index']
  #allocation1 [shape = 'u32[144,128]{1,0:T(1,128)}', space=vmem, size = 0x12000, scoped, tag = 'internal scratch']
  %s0 = inlined_call_operand.vmem [shape: f32[256,128], index: 0, kind: input, shape index: {}]
  %s1 = inlined_call_operand.vmem [shape: f32[16,128], index: 1, kind: input, shape index: {}]
  %s2 = inlined_call_operand.vmem [shape: bf16[128,128], index: 2, kind: input, shape index: {}]
  %s3 = inlined_call_operand.vmem [shape: bf16[128,128], index: 3, kind: input, shape index: {}]
  %s4 = inlined_call_operand.vmem [shape: bf16[128,128], index: 4, kind: input, shape index: {}]
  %s5 = inlined_call_operand.vmem [shape: bf16[128,128], index: 5, kind: input, shape index: {}]
  %s6 = inlined_call_operand.vmem [shape: f32[256,128], index: 6, kind: output, shape index: {}]
  %s7 = sld [smem:[#allocation0]]
  $region34: #{_mlp_skipper_impl.1} parent=0
    _
  %s9 = ssub.s32 1, %s7
  %s10 = scalar_select 0, %s9, %s7
  // Predicated region
  $region2: #{_mlp_skipper_impl.1} parent=0 // pred_check
    _
  $region3: #{_mlp_skipper_impl.1} parent=0 // pred_check_branch
    %12 = sbr.rel (0) target = $region5
  $region4: #{_mlp_skipper_impl.1} parent=0 // pred_region
    _
  $region5: #{_mlp_skipper_impl.1} parent=0 // pred_fallthru
    _
  // Predicated region
  $region6: #{_mlp_skipper_impl.1} parent=0 // pred_check
    _
  $region7: #{_mlp_skipper_impl.1} parent=0 // pred_check_branch
    %14 = sbr.rel (0) target = $region9
  $region8: #{_mlp_skipper_impl.1} parent=0 // pred_region
    _
  $region9: #{_mlp_skipper_impl.1} parent=0 // pred_fallthru
    _
  // Predicated region
  $region10: #{_mlp_skipper_impl.1} parent=0 // pred_check
    _
  $region11: #{_mlp_skipper_impl.1} parent=0 // pred_check_branch
    %16 = sbr.rel (0) target = $region13
  $region12: #{_mlp_skipper_impl.1} parent=0 // pred_region
    _
  $region13: #{_mlp_skipper_impl.1} parent=0 // pred_fallthru
    _
  // Predicated region
  $region14: #{_mlp_skipper_impl.1} parent=0 // pred_check
    _
  $region15: #{_mlp_skipper_impl.1} parent=0 // pred_check_branch
    %18 = sbr.rel (0) target = $region17
  $region16: #{_mlp_skipper_impl.1} parent=0 // pred_region
    _
  $region17: #{_mlp_skipper_impl.1} parent=0 // pred_fallthru
    _
  // Predicated region
  $region18: #{_mlp_skipper_impl.1} parent=0 // pred_check
    _
  $region19: #{_mlp_skipper_impl.1} parent=0 // pred_check_branch
    %20 = sbr.rel (0) target = $region21
  $region20: #{_mlp_skipper_impl.1} parent=0 // pred_region
    _
  $region21: #{_mlp_skipper_impl.1} parent=0 // pred_fallthru
    _
  // Predicated region
  $region22: #{_mlp_skipper_impl.1} parent=0 // pred_check
    _
  $region23: #{_mlp_skipper_impl.1} parent=0 // pred_check_branch
    %22 = sbr.rel (0) target = $region25
  $region24: #{_mlp_skipper_impl.1} parent=0 // pred_region
    _
  $region25: #{_mlp_skipper_impl.1} parent=0 // pred_fallthru
    _
  %v24 = vld [vmem:[%s1 + $0xa] sm:$0x1]
  %v25 = vld [vmem:[%s1 + $0xb] sm:$0x1]
  %v26 = vld [vmem:[%s0] sm:$0xff]
  %v27 = vld [vmem:[%s0 + $0x8] sm:$0xff]
  %v28 = vld [vmem:[%s0 + $0x10] sm:$0xff]
  %v29 = vld [vmem:[%s0 + $0x18] sm:$0xff]
  %v30 = vld [vmem:[%s0 + $0x20] sm:$0xff]
  %v31 = vld [vmem:[%s0 + $0x28] sm:$0xff]
  %v32 = vld [vmem:[%s0 + $0x30] sm:$0xff]
  %v33 = vld [vmem:[%s0 + $0x38] sm:$0xff]
  %v34 = vld [vmem:[%s0 + $0x40] sm:$0xff]
  %v35 = vld [vmem:[%s0 + $0x48] sm:$0xff]
  %v36 = vld [vmem:[%s0 + $0x50] sm:$0xff]
  %v37 = vld [vmem:[%s0 + $0x58] sm:$0xff]
  %v38 = vld [vmem:[%s0 + $0x60] sm:$0xff]
  %v39 = vld [vmem:[%s0 + $0x68] sm:$0xff]
  %v40 = vld [vmem:[%s0 + $0x70] sm:$0xff]
  %v41 = vld [vmem:[%s0 + $0x78] sm:$0xff]
  %v42 = vld [vmem:[%s0 + $0x80] sm:$0xff]
  %v43 = vld [vmem:[%s0 + $0x88] sm:$0xff]
  %v44 = vld [vmem:[%s0 + $0x90] sm:$0xff]
  %v45 = vld [vmem:[%s0 + $0x98] sm:$0xff]
  %v46 = vld [vmem:[%s0 + $0xa0] sm:$0xff]
  %v47 = vld [vmem:[%s0 + $0xa8] sm:$0xff]
  %v48 = vld [vmem:[%s0 + $0xb0] sm:$0xff]
  %v49 = vld [vmem:[%s0 + $0xb8] sm:$0xff]
  %v50 = vld [vmem:[%s0 + $0xc0] sm:$0xff]
  %v51 = vld [vmem:[%s0 + $0xc8] sm:$0xff]
  %v52 = vld [vmem:[%s0 + $0xd0] sm:$0xff]
  %v53 = vld [vmem:[%s0 + $0xd8] sm:$0xff]
  %v54 = vld [vmem:[%s0 + $0xe0] sm:$0xff]
  %v55 = vld [vmem:[%s0 + $0xe8] sm:$0xff]
  %v56 = vld [vmem:[%s0 + $0xf0] sm:$0xff]
  %v57 = vld [vmem:[%s0 + $0xf8] sm:$0xff]
  %v58 = vld [vmem:[%s1] sm:$0x1]
  %v59 = vld [vmem:[%s1 + $0x1] sm:$0x1]
  %60 = vadd.xlane.f32.xlu0 %v26
  %v61 = vpop.xlane.xlu0 %60
  %62 = vadd.xlane.f32.xlu0 %v27
  %v63 = vpop.xlane.xlu0 %62
  %64 = vadd.xlane.f32.xlu0 %v28
  %v65 = vpop.xlane.xlu0 %64
  %66 = vadd.xlane.f32.xlu0 %v29
  %v67 = vpop.xlane.xlu0 %66
  %68 = vadd.xlane.f32.xlu0 %v30
  %v69 = vpop.xlane.xlu0 %68
  %70 = vadd.xlane.f32.xlu0 %v31
  %v71 = vpop.xlane.xlu0 %70
  %72 = vadd.xlane.f32.xlu0 %v32
  %v73 = vpop.xlane.xlu0 %72
  %74 = vadd.xlane.f32.xlu0 %v33
  %v75 = vpop.xlane.xlu0 %74
  %76 = vadd.xlane.f32.xlu0 %v34
  %v77 = vpop.xlane.xlu0 %76
  %78 = vadd.xlane.f32.xlu0 %v35
  %v79 = vpop.xlane.xlu0 %78
  %80 = vadd.xlane.f32.xlu0 %v36
  %v81 = vpop.xlane.xlu0 %80
  %82 = vadd.xlane.f32.xlu0 %v37
  %v83 = vpop.xlane.xlu0 %82
  %84 = vadd.xlane.f32.xlu0 %v38
  %v85 = vpop.xlane.xlu0 %84
  %86 = vadd.xlane.f32.xlu0 %v39
  %v87 = vpop.xlane.xlu0 %86
  %88 = vadd.xlane.f32.xlu0 %v40
  %v89 = vpop.xlane.xlu0 %88
  %90 = vadd.xlane.f32.xlu0 %v41
  %v91 = vpop.xlane.xlu0 %90
  %92 = vadd.xlane.f32.xlu0 %v42
  %v93 = vpop.xlane.xlu0 %92
  %94 = vadd.xlane.f32.xlu0 %v43
  %v95 = vpop.xlane.xlu0 %94
  %96 = vadd.xlane.f32.xlu0 %v44
  %v97 = vpop.xlane.xlu0 %96
  %98 = vadd.xlane.f32.xlu0 %v45
  %v99 = vpop.xlane.xlu0 %98
  %100 = vadd.xlane.f32.xlu0 %v46
  %v101 = vpop.xlane.xlu0 %100
  %102 = vadd.xlane.f32.xlu0 %v47
  %v103 = vpop.xlane.xlu0 %102
  %104 = vadd.xlane.f32.xlu0 %v48
  %v105 = vpop.xlane.xlu0 %104
  %106 = vadd.xlane.f32.xlu0 %v49
  %v107 = vpop.xlane.xlu0 %106
  %108 = vadd.xlane.f32.xlu0 %v50
  %v109 = vpop.xlane.xlu0 %108
  %110 = vadd.xlane.f32.xlu0 %v51
  %v111 = vpop.xlane.xlu0 %110
  %112 = vadd.xlane.f32.xlu0 %v52
  %v113 = vpop.xlane.xlu0 %112
  %114 = vadd.xlane.f32.xlu0 %v53
  %v115 = vpop.xlane.xlu0 %114
  %116 = vadd.xlane.f32.xlu0 %v54
  %v117 = vpop.xlane.xlu0 %116
  %118 = vadd.xlane.f32.xlu0 %v55
  %v119 = vpop.xlane.xlu0 %118
  %120 = vadd.xlane.f32.xlu0 %v56
  %v121 = vpop.xlane.xlu0 %120
  %122 = vadd.xlane.f32.xlu0 %v57
  %v123 = vpop.xlane.xlu0 %122
  %v124 = vmul.f32 %v61, 0.0625
  %v125 = vmul.f32 %v63, 0.0625
  %v126 = vmul.f32 %v65, 0.0625
  %v127 = vmul.f32 %v67, 0.0625
  %v128 = vmul.f32 %v69, 0.0625
  %v129 = vmul.f32 %v71, 0.0625
  %v130 = vmul.f32 %v73, 0.0625
  %v131 = vmul.f32 %v75, 0.0625
  %v132 = vmul.f32 %v77, 0.0625
  %v133 = vmul.f32 %v79, 0.0625
  %v134 = vmul.f32 %v81, 0.0625
  %v135 = vmul.f32 %v83, 0.0625
  %v136 = vmul.f32 %v85, 0.0625
  %v137 = vmul.f32 %v87, 0.0625
  %v138 = vmul.f32 %v89, 0.0625
  %v139 = vmul.f32 %v91, 0.0625
  %v140 = vmul.f32 %v93, 0.0625
  %v141 = vmul.f32 %v95, 0.0625
  %v142 = vmul.f32 %v97, 0.0625
  %v143 = vmul.f32 %v99, 0.0625
  %v144 = vmul.f32 %v101, 0.0625
  %v145 = vmul.f32 %v103, 0.0625
  %v146 = vmul.f32 %v105, 0.0625
  %v147 = vmul.f32 %v107, 0.0625
  %v148 = vmul.f32 %v109, 0.0625
  %v149 = vmul.f32 %v111, 0.0625
  %v150 = vmul.f32 %v113, 0.0625
  %v151 = vmul.f32 %v115, 0.0625
  %v152 = vmul.f32 %v117, 0.0625
  %v153 = vmul.f32 %v119, 0.0625
  %v154 = vmul.f32 %v121, 0.0625
  %v155 = vmul.f32 %v123, 0.0625
  %v156 = vsub.f32 %v26, %v124
  %v157 = vsub.f32 %v27, %v125
  %v158 = vsub.f32 %v28, %v126
  %v159 = vsub.f32 %v29, %v127
  %v160 = vsub.f32 %v30, %v128
  %v161 = vsub.f32 %v31, %v129
  %v162 = vsub.f32 %v32, %v130
  %v163 = vsub.f32 %v33, %v131
  %v164 = vsub.f32 %v34, %v132
  %v165 = vsub.f32 %v35, %v133
  %v166 = vsub.f32 %v36, %v134
  %v167 = vsub.f32 %v37, %v135
  %v168 = vsub.f32 %v38, %v136
  %v169 = vsub.f32 %v39, %v137
  %v170 = vsub.f32 %v40, %v138
  %v171 = vsub.f32 %v41, %v139
  %v172 = vsub.f32 %v42, %v140
  %v173 = vsub.f32 %v43, %v141
  %v174 = vsub.f32 %v44, %v142
  %v175 = vsub.f32 %v45, %v143
  %v176 = vsub.f32 %v46, %v144
  %v177 = vsub.f32 %v47, %v145
  %v178 = vsub.f32 %v48, %v146
  %v179 = vsub.f32 %v49, %v147
  %v180 = vsub.f32 %v50, %v148
  %v181 = vsub.f32 %v51, %v149
  %v182 = vsub.f32 %v52, %v150
  %v183 = vsub.f32 %v53, %v151
  %v184 = vsub.f32 %v54, %v152
  %v185 = vsub.f32 %v55, %v153
  %v186 = vsub.f32 %v56, %v154
  %v187 = vsub.f32 %v57, %v155
  %v188 = vlaneseq
  %v189 = vshrl.u32 %v188, 7
  %v190 = vsub.s32 0, %v189
  %v191 = vrot.slane %v24, %v190
  %v192 = vmul.f32 %v156, %v191
  %v193 = vmul.f32 %v157, %v191
  %v194 = vmul.f32 %v158, %v191
  %v195 = vmul.f32 %v159, %v191
  %v196 = vmul.f32 %v160, %v191
  %v197 = vmul.f32 %v161, %v191
  %v198 = vmul.f32 %v162, %v191
  %v199 = vmul.f32 %v163, %v191
  %v200 = vmul.f32 %v164, %v191
  %v201 = vmul.f32 %v165, %v191
  %v202 = vmul.f32 %v166, %v191
  %v203 = vmul.f32 %v167, %v191
  %v204 = vmul.f32 %v168, %v191
  %v205 = vmul.f32 %v169, %v191
  %v206 = vmul.f32 %v170, %v191
  %v207 = vmul.f32 %v171, %v191
  %v208 = vmul.f32 %v172, %v191
  %v209 = vmul.f32 %v173, %v191
  %v210 = vmul.f32 %v174, %v191
  %v211 = vmul.f32 %v175, %v191
  %v212 = vmul.f32 %v176, %v191
  %v213 = vmul.f32 %v177, %v191
  %v214 = vmul.f32 %v178, %v191
  %v215 = vmul.f32 %v179, %v191
  %v216 = vmul.f32 %v180, %v191
  %v217 = vmul.f32 %v181, %v191
  %v218 = vmul.f32 %v182, %v191
  %v219 = vmul.f32 %v183, %v191
  %v220 = vmul.f32 %v184, %v191
  %v221 = vmul.f32 %v185, %v191
  %v222 = vmul.f32 %v186, %v191
  %v223 = vmul.f32 %v187, %v191
  %v224 = vmul.f32 %v192, %v192
  %v225 = vmul.f32 %v193, %v193
  %v226 = vmul.f32 %v194, %v194
  %v227 = vmul.f32 %v195, %v195
  %v228 = vmul.f32 %v196, %v196
  %v229 = vmul.f32 %v197, %v197
  %v230 = vmul.f32 %v198, %v198
  %v231 = vmul.f32 %v199, %v199
  %v232 = vmul.f32 %v200, %v200
  %v233 = vmul.f32 %v201, %v201
  %v234 = vmul.f32 %v202, %v202
  %v235 = vmul.f32 %v203, %v203
  %v236 = vmul.f32 %v204, %v204
  %v237 = vmul.f32 %v205, %v205
  %v238 = vmul.f32 %v206, %v206
  %v239 = vmul.f32 %v207, %v207
  %v240 = vmul.f32 %v208, %v208
  %v241 = vmul.f32 %v209, %v209
  %v242 = vmul.f32 %v210, %v210
  %v243 = vmul.f32 %v211, %v211
  %v244 = vmul.f32 %v212, %v212
  %v245 = vmul.f32 %v213, %v213
  %v246 = vmul.f32 %v214, %v214
  %v247 = vmul.f32 %v215, %v215
  %v248 = vmul.f32 %v216, %v216
  %v249 = vmul.f32 %v217, %v217
  %v250 = vmul.f32 %v218, %v218
  %v251 = vmul.f32 %v219, %v219
  %v252 = vmul.f32 %v220, %v220
  %v253 = vmul.f32 %v221, %v221
  %v254 = vmul.f32 %v222, %v222
  %v255 = vmul.f32 %v223, %v223
  %256 = vadd.xlane.f32.xlu0 %v224
  %v257 = vpop.xlane.xlu0 %256
  %258 = vadd.xlane.f32.xlu0 %v225
  %v259 = vpop.xlane.xlu0 %258
  %260 = vadd.xlane.f32.xlu0 %v226
  %v261 = vpop.xlane.xlu0 %260
  %262 = vadd.xlane.f32.xlu0 %v227
  %v263 = vpop.xlane.xlu0 %262
  %264 = vadd.xlane.f32.xlu0 %v228
  %v265 = vpop.xlane.xlu0 %264
  %266 = vadd.xlane.f32.xlu0 %v229
  %v267 = vpop.xlane.xlu0 %266
  %268 = vadd.xlane.f32.xlu0 %v230
  %v269 = vpop.xlane.xlu0 %268
  %270 = vadd.xlane.f32.xlu0 %v231
  %v271 = vpop.xlane.xlu0 %270
  %272 = vadd.xlane.f32.xlu0 %v232
  %v273 = vpop.xlane.xlu0 %272
  %274 = vadd.xlane.f32.xlu0 %v233
  %v275 = vpop.xlane.xlu0 %274
  %276 = vadd.xlane.f32.xlu0 %v234
  %v277 = vpop.xlane.xlu0 %276
  %278 = vadd.xlane.f32.xlu0 %v235
  %v279 = vpop.xlane.xlu0 %278
  %280 = vadd.xlane.f32.xlu0 %v236
  %v281 = vpop.xlane.xlu0 %280
  %282 = vadd.xlane.f32.xlu0 %v237
  %v283 = vpop.xlane.xlu0 %282
  %284 = vadd.xlane.f32.xlu0 %v238
  %v285 = vpop.xlane.xlu0 %284
  %286 = vadd.xlane.f32.xlu0 %v239
  %v287 = vpop.xlane.xlu0 %286
  %288 = vadd.xlane.f32.xlu0 %v240
  %v289 = vpop.xlane.xlu0 %288
  %290 = vadd.xlane.f32.xlu0 %v241
  %v291 = vpop.xlane.xlu0 %290
  %292 = vadd.xlane.f32.xlu0 %v242
  %v293 = vpop.xlane.xlu0 %292
  %294 = vadd.xlane.f32.xlu0 %v243
  %v295 = vpop.xlane.xlu0 %294
  %296 = vadd.xlane.f32.xlu0 %v244
  %v297 = vpop.xlane.xlu0 %296
  %298 = vadd.xlane.f32.xlu0 %v245
  %v299 = vpop.xlane.xlu0 %298
  %300 = vadd.xlane.f32.xlu0 %v246
  %v301 = vpop.xlane.xlu0 %300
  %302 = vadd.xlane.f32.xlu0 %v247
  %v303 = vpop.xlane.xlu0 %302
  %304 = vadd.xlane.f32.xlu0 %v248
  %v305 = vpop.xlane.xlu0 %304
  %306 = vadd.xlane.f32.xlu0 %v249
  %v307 = vpop.xlane.xlu0 %306
  %308 = vadd.xlane.f32.xlu0 %v250
  %v309 = vpop.xlane.xlu0 %308
  %310 = vadd.xlane.f32.xlu0 %v251
  %v311 = vpop.xlane.xlu0 %310
  %312 = vadd.xlane.f32.xlu0 %v252
  %v313 = vpop.xlane.xlu0 %312
  %314 = vadd.xlane.f32.xlu0 %v253
  %v315 = vpop.xlane.xlu0 %314
  %316 = vadd.xlane.f32.xlu0 %v254
  %v317 = vpop.xlane.xlu0 %316
  %318 = vadd.xlane.f32.xlu0 %v255
  %v319 = vpop.xlane.xlu0 %318
  %v320 = vmul.f32 %v257, 0.0625
  %v321 = vmul.f32 %v259, 0.0625
  %v322 = vmul.f32 %v261, 0.0625
  %v323 = vmul.f32 %v263, 0.0625
  %v324 = vmul.f32 %v265, 0.0625
  %v325 = vmul.f32 %v267, 0.0625
  %v326 = vmul.f32 %v269, 0.0625
  %v327 = vmul.f32 %v271, 0.0625
  %v328 = vmul.f32 %v273, 0.0625
  %v329 = vmul.f32 %v275, 0.0625
  %v330 = vmul.f32 %v277, 0.0625
  %v331 = vmul.f32 %v279, 0.0625
  %v332 = vmul.f32 %v281, 0.0625
  %v333 = vmul.f32 %v283, 0.0625
  %v334 = vmul.f32 %v285, 0.0625
  %v335 = vmul.f32 %v287, 0.0625
  %v336 = vmul.f32 %v289, 0.0625
  %v337 = vmul.f32 %v291, 0.0625
  %v338 = vmul.f32 %v293, 0.0625
  %v339 = vmul.f32 %v295, 0.0625
  %v340 = vmul.f32 %v297, 0.0625
  %v341 = vmul.f32 %v299, 0.0625
  %v342 = vmul.f32 %v301, 0.0625
  %v343 = vmul.f32 %v303, 0.0625
  %v344 = vmul.f32 %v305, 0.0625
  %v345 = vmul.f32 %v307, 0.0625
  %v346 = vmul.f32 %v309, 0.0625
  %v347 = vmul.f32 %v311, 0.0625
  %v348 = vmul.f32 %v313, 0.0625
  %v349 = vmul.f32 %v315, 0.0625
  %v350 = vmul.f32 %v317, 0.0625
  %v351 = vmul.f32 %v319, 0.0625
  %v352 = vadd.f32 %v320, 1e-05
  %v353 = vadd.f32 %v321, 1e-05
  %v354 = vadd.f32 %v322, 1e-05
  %v355 = vadd.f32 %v323, 1e-05
  %v356 = vadd.f32 %v324, 1e-05
  %v357 = vadd.f32 %v325, 1e-05
  %v358 = vadd.f32 %v326, 1e-05
  %v359 = vadd.f32 %v327, 1e-05
  %v360 = vadd.f32 %v328, 1e-05
  %v361 = vadd.f32 %v329, 1e-05
  %v362 = vadd.f32 %v330, 1e-05
  %v363 = vadd.f32 %v331, 1e-05
  %v364 = vadd.f32 %v332, 1e-05
  %v365 = vadd.f32 %v333, 1e-05
  %v366 = vadd.f32 %v334, 1e-05
  %v367 = vadd.f32 %v335, 1e-05
  %v368 = vadd.f32 %v336, 1e-05
  %v369 = vadd.f32 %v337, 1e-05
  %v370 = vadd.f32 %v338, 1e-05
  %v371 = vadd.f32 %v339, 1e-05
  %v372 = vadd.f32 %v340, 1e-05
  %v373 = vadd.f32 %v341, 1e-05
  %v374 = vadd.f32 %v342, 1e-05
  %v375 = vadd.f32 %v343, 1e-05
  %v376 = vadd.f32 %v344, 1e-05
  %v377 = vadd.f32 %v345, 1e-05
  %v378 = vadd.f32 %v346, 1e-05
  %v379 = vadd.f32 %v347, 1e-05
  %v380 = vadd.f32 %v348, 1e-05
  %v381 = vadd.f32 %v349, 1e-05
  %v382 = vadd.f32 %v350, 1e-05
  %v383 = vadd.f32 %v351, 1e-05
  %v384 = vrsqrt.pop %v352
  %v385 = vrsqrt.pop %v353
  %v386 = vrsqrt.pop %v354
  %v387 = vrsqrt.pop %v355
  %v388 = vrsqrt.pop %v356
  %v389 = vrsqrt.pop %v357
  %v390 = vrsqrt.pop %v358
  %v391 = vrsqrt.pop %v359
  %v392 = vrsqrt.pop %v360
  %v393 = vrsqrt.pop %v361
  %v394 = vrsqrt.pop %v362
  %v395 = vrsqrt.pop %v363
  %v396 = vrsqrt.pop %v364
  %v397 = vrsqrt.pop %v365
  %v398 = vrsqrt.pop %v366
  %v399 = vrsqrt.pop %v367
  %v400 = vrsqrt.pop %v368
  %v401 = vrsqrt.pop %v369
  %v402 = vrsqrt.pop %v370
  %v403 = vrsqrt.pop %v371
  %v404 = vrsqrt.pop %v372
  %v405 = vrsqrt.pop %v373
  %v406 = vrsqrt.pop %v374
  %v407 = vrsqrt.pop %v375
  %v408 = vrsqrt.pop %v376
  %v409 = vrsqrt.pop %v377
  %v410 = vrsqrt.pop %v378
  %v411 = vrsqrt.pop %v379
  %v412 = vrsqrt.pop %v380
  %v413 = vrsqrt.pop %v381
  %v414 = vrsqrt.pop %v382
  %v415 = vrsqrt.pop %v383
  %v416 = vmul.f32 %v192, %v384
  %v417 = vmul.f32 %v193, %v385
  %v418 = vmul.f32 %v194, %v386
  %v419 = vmul.f32 %v195, %v387
  %v420 = vmul.f32 %v196, %v388
  %v421 = vmul.f32 %v197, %v389
  %v422 = vmul.f32 %v198, %v390
  %v423 = vmul.f32 %v199, %v391
  %v424 = vmul.f32 %v200, %v392
  %v425 = vmul.f32 %v201, %v393
  %v426 = vmul.f32 %v202, %v394
  %v427 = vmul.f32 %v203, %v395
  %v428 = vmul.f32 %v204, %v396
  %v429 = vmul.f32 %v205, %v397
  %v430 = vmul.f32 %v206, %v398
  %v431 = vmul.f32 %v207, %v399
  %v432 = vmul.f32 %v208, %v400
  %v433 = vmul.f32 %v209, %v401
  %v434 = vmul.f32 %v210, %v402
  %v435 = vmul.f32 %v211, %v403
  %v436 = vmul.f32 %v212, %v404
  %v437 = vmul.f32 %v213, %v405
  %v438 = vmul.f32 %v214, %v406
  %v439 = vmul.f32 %v215, %v407
  %v440 = vmul.f32 %v216, %v408
  %v441 = vmul.f32 %v217, %v409
  %v442 = vmul.f32 %v218, %v410
  %v443 = vmul.f32 %v219, %v411
  %v444 = vmul.f32 %v220, %v412
  %v445 = vmul.f32 %v221, %v413
  %v446 = vmul.f32 %v222, %v414
  %v447 = vmul.f32 %v223, %v415
  %v448 = vlaneseq
  %v449 = vshrl.u32 %v448, 7
  %v450 = vsub.s32 0, %v449
  %v451 = vrot.slane %v58, %v450
  %v452 = vmul.f32 %v416, %v451
  %v453 = vmul.f32 %v417, %v451
  %v454 = vmul.f32 %v418, %v451
  %v455 = vmul.f32 %v419, %v451
  %v456 = vmul.f32 %v420, %v451
  %v457 = vmul.f32 %v421, %v451
  %v458 = vmul.f32 %v422, %v451
  %v459 = vmul.f32 %v423, %v451
  %v460 = vmul.f32 %v424, %v451
  %v461 = vmul.f32 %v425, %v451
  %v462 = vmul.f32 %v426, %v451
  %v463 = vmul.f32 %v427, %v451
  %v464 = vmul.f32 %v428, %v451
  %v465 = vmul.f32 %v429, %v451
  %v466 = vmul.f32 %v430, %v451
  %v467 = vmul.f32 %v431, %v451
  %v468 = vmul.f32 %v432, %v451
  %v469 = vmul.f32 %v433, %v451
  %v470 = vmul.f32 %v434, %v451
  %v471 = vmul.f32 %v435, %v451
  %v472 = vmul.f32 %v436, %v451
  %v473 = vmul.f32 %v437, %v451
  %v474 = vmul.f32 %v438, %v451
  %v475 = vmul.f32 %v439, %v451
  %v476 = vmul.f32 %v440, %v451
  %v477 = vmul.f32 %v441, %v451
  %v478 = vmul.f32 %v442, %v451
  %v479 = vmul.f32 %v443, %v451
  %v480 = vmul.f32 %v444, %v451
  %v481 = vmul.f32 %v445, %v451
  %v482 = vmul.f32 %v446, %v451
  %v483 = vmul.f32 %v447, %v451
  %v484 = vlaneseq
  %v485 = vshrl.u32 %v484, 7
  %v486 = vsub.s32 0, %v485
  %v487 = vrot.slane %v59, %v486
  %v488 = vadd.f32 %v452, %v487
  %v489 = vadd.f32 %v453, %v487
  %v490 = vadd.f32 %v454, %v487
  %v491 = vadd.f32 %v455, %v487
  %v492 = vadd.f32 %v456, %v487
  %v493 = vadd.f32 %v457, %v487
  %v494 = vadd.f32 %v458, %v487
  %v495 = vadd.f32 %v459, %v487
  %v496 = vadd.f32 %v460, %v487
  %v497 = vadd.f32 %v461, %v487
  %v498 = vadd.f32 %v462, %v487
  %v499 = vadd.f32 %v463, %v487
  %v500 = vadd.f32 %v464, %v487
  %v501 = vadd.f32 %v465, %v487
  %v502 = vadd.f32 %v466, %v487
  %v503 = vadd.f32 %v467, %v487
  %v504 = vadd.f32 %v468, %v487
  %v505 = vadd.f32 %v469, %v487
  %v506 = vadd.f32 %v470, %v487
  %v507 = vadd.f32 %v471, %v487
  %v508 = vadd.f32 %v472, %v487
  %v509 = vadd.f32 %v473, %v487
  %v510 = vadd.f32 %v474, %v487
  %v511 = vadd.f32 %v475, %v487
  %v512 = vadd.f32 %v476, %v487
  %v513 = vadd.f32 %v477, %v487
  %v514 = vadd.f32 %v478, %v487
  %v515 = vadd.f32 %v479, %v487
  %v516 = vadd.f32 %v480, %v487
  %v517 = vadd.f32 %v481, %v487
  %v518 = vadd.f32 %v482, %v487
  %v519 = vadd.f32 %v483, %v487
  %v520 = vpack.c.bf16 %v489, %v488
  %v521 = vpack.c.bf16 %v491, %v490
  %v522 = vpack.c.bf16 %v493, %v492
  %v523 = vpack.c.bf16 %v495, %v494
  %v524 = vpack.c.bf16 %v497, %v496
  %v525 = vpack.c.bf16 %v499, %v498
  %v526 = vpack.c.bf16 %v501, %v500
  %v527 = vpack.c.bf16 %v503, %v502
  %v528 = vpack.c.bf16 %v505, %v504
  %v529 = vpack.c.bf16 %v507, %v506
  %v530 = vpack.c.bf16 %v509, %v508
  %v531 = vpack.c.bf16 %v511, %v510
  %v532 = vpack.c.bf16 %v513, %v512
  %v533 = vpack.c.bf16 %v515, %v514
  %v534 = vpack.c.bf16 %v517, %v516
  %v535 = vpack.c.bf16 %v519, %v518
  %v536 = vld [vmem:[%s2] sm:$0xf]
  %v537 = vld [vmem:[%s2 + $0x4] sm:$0xf]
  %v538 = vld [vmem:[%s2 + $0x8] sm:$0xf]
  %v539 = vld [vmem:[%s2 + $0xc] sm:$0xf]
  %v540 = vld [vmem:[%s2 + $0x10] sm:$0xf]
  %v541 = vld [vmem:[%s2 + $0x14] sm:$0xf]
  %v542 = vld [vmem:[%s2 + $0x18] sm:$0xf]
  %v543 = vld [vmem:[%s2 + $0x1c] sm:$0xf]
  %v544 = vld [vmem:[%s2 + $0x20] sm:$0xf]
  %v545 = vld [vmem:[%s2 + $0x24] sm:$0xf]
  %v546 = vld [vmem:[%s2 + $0x28] sm:$0xf]
  %v547 = vld [vmem:[%s2 + $0x2c] sm:$0xf]
  %v548 = vld [vmem:[%s2 + $0x30] sm:$0xf]
  %v549 = vld [vmem:[%s2 + $0x34] sm:$0xf]
  %v550 = vld [vmem:[%s2 + $0x38] sm:$0xf]
  %v551 = vld [vmem:[%s2 + $0x3c] sm:$0xf]
  %v552 = vld [vmem:[%s1 + $0x2] sm:$0x1]
  %v553 = vlaneseq
  %v554 = vshrl.u32 %v553, 7
  %v555 = vsub.s32 0, %v554
  %v556 = vrot.slane %v552, %v555
  %v573 = vunpack.c.l.b16 %v536
  %v574 = vunpack.c.l.b16 %v537
  %v575 = vunpack.c.l.b16 %v538
  %v576 = vunpack.c.l.b16 %v539
  %v577 = vunpack.c.l.b16 %v540
  %v578 = vunpack.c.l.b16 %v541
  %v579 = vunpack.c.l.b16 %v542
  %v580 = vunpack.c.l.b16 %v543
  %v581 = vunpack.c.l.b16 %v544
  %v582 = vunpack.c.l.b16 %v545
  %v583 = vunpack.c.l.b16 %v546
  %v584 = vunpack.c.l.b16 %v547
  %v585 = vunpack.c.l.b16 %v548
  %v586 = vunpack.c.l.b16 %v549
  %v587 = vunpack.c.l.b16 %v550
  %v588 = vunpack.c.l.b16 %v551
  %v589 = vpack.c.b16 %v574, %v573
  %v590 = vpack.c.b16 %v576, %v575
  %v591 = vpack.c.b16 %v578, %v577
  %v592 = vpack.c.b16 %v580, %v579
  %v593 = vpack.c.b16 %v582, %v581
  %v594 = vpack.c.b16 %v584, %v583
  %v595 = vpack.c.b16 %v586, %v585
  %v596 = vpack.c.b16 %v588, %v587
  %605 = vmatprep.subr.bf16.mxu0 0
  %606 = vmatpush1.bf16.msra.mxu0 %v589
  %607 = vmatprep.subr.bf16.mxu0 0
  %608 = vmatpush1.bf16.msra.mxu0 %v590
  %609 = vmatprep.subr.bf16.mxu0 0
  %610 = vmatpush1.bf16.msra.mxu0 %v591
  %611 = vmatprep.subr.bf16.mxu0 0
  %612 = vmatpush1.bf16.msra.mxu0 %v592
  %613 = vmatprep.subr.bf16.mxu0 0
  %614 = vmatpush1.bf16.msra.mxu0 %v593
  %615 = vmatprep.subr.bf16.mxu0 0
  %616 = vmatpush1.bf16.msra.mxu0 %v594
  %617 = vmatprep.subr.bf16.mxu0 0
  %618 = vmatpush1.bf16.msra.mxu0 %v595
  %619 = vmatprep.subr.bf16.mxu0 0
  %620 = vmatpush1.bf16.msra.mxu0 %v596
  %621 = vmatprep.subr.bf16.mxu0 0
  %622 = vmatpush1.bf16.msra.mxu0 0
  %623 = vmatprep.subr.bf16.mxu0 0
  %624 = vmatpush1.bf16.msra.mxu0 0
  %625 = vmatprep.subr.bf16.mxu0 0
  %626 = vmatpush1.bf16.msra.mxu0 0
  %627 = vmatprep.subr.bf16.mxu0 0
  %628 = vmatpush1.bf16.msra.mxu0 0
  %629 = vmatprep.subr.bf16.mxu0 0
  %630 = vmatpush1.bf16.msra.mxu0 0
  %631 = vmatprep.subr.bf16.mxu0 0
  %632 = vmatpush1.bf16.msra.mxu0 0
  %633 = vmatprep.subr.bf16.mxu0 0
  %634 = vmatpush1.bf16.msra.mxu0 0
  %635 = vmatprep.subr.bf16.mxu0 0
  %636 = vmatpush1.bf16.msra.mxu0 0
  %637 = vmatprep.mubr.bf16.mxu0 0
  %638 = vmatmul.mubr.bf16.gmra.mrb[0].mxu0 %v520
  %v639 = vpop.f32.mrb[0].mxu0
  %v640 = vadd.f32 %v556, %v639
  %v641 = vpop.f32.mrb[0].mxu0
  %v642 = vpop.f32.mrb[0].mxu0
  %v643 = vadd.f32 %v556, %v642
  %v644 = vpop.f32.mrb[0].mxu0
  %645 = vmatprep.mubr.bf16.mxu0 0
  %646 = vmatmul.mubr.bf16.gmra.mrb[0].mxu0 %v521
  %v647 = vpop.f32.mrb[0].mxu0
  %v648 = vadd.f32 %v556, %v647
  %v649 = vpop.f32.mrb[0].mxu0
  %v650 = vpop.f32.mrb[0].mxu0
  %v651 = vadd.f32 %v556, %v650
  %v652 = vpop.f32.mrb[0].mxu0
  %653 = vmatprep.mubr.bf16.mxu0 0
  %654 = vmatmul.mubr.bf16.gmra.mrb[0].mxu0 %v522
  %v655 = vpop.f32.mrb[0].mxu0
  %v656 = vadd.f32 %v556, %v655
  %v657 = vpop.f32.mrb[0].mxu0
  %v658 = vpop.f32.mrb[0].mxu0
  %v659 = vadd.f32 %v556, %v658
  %v660 = vpop.f32.mrb[0].mxu0
  %661 = vmatprep.mubr.bf16.mxu0 0
  %662 = vmatmul.mubr.bf16.gmra.mrb[0].mxu0 %v523
  %v663 = vpop.f32.mrb[0].mxu0
  %v664 = vadd.f32 %v556, %v663
  %v665 = vpop.f32.mrb[0].mxu0
  %v666 = vpop.f32.mrb[0].mxu0
  %v667 = vadd.f32 %v556, %v666
  %v668 = vpop.f32.mrb[0].mxu0
  %669 = vmatprep.mubr.bf16.mxu0 0
  %670 = vmatmul.mubr.bf16.gmra.mrb[0].mxu0 %v524
  %v671 = vpop.f32.mrb[0].mxu0
  %v672 = vadd.f32 %v556, %v671
  %v673 = vpop.f32.mrb[0].mxu0
  %v674 = vpop.f32.mrb[0].mxu0
  %v675 = vadd.f32 %v556, %v674
  %v676 = vpop.f32.mrb[0].mxu0
  %677 = vmatprep.mubr.bf16.mxu0 0
  %678 = vmatmul.mubr.bf16.gmra.mrb[0].mxu0 %v525
  %v679 = vpop.f32.mrb[0].mxu0
  %v680 = vadd.f32 %v556, %v679
  %v681 = vpop.f32.mrb[0].mxu0
  %v682 = vpop.f32.mrb[0].mxu0
  %v683 = vadd.f32 %v556, %v682
  %v684 = vpop.f32.mrb[0].mxu0
  %685 = vmatprep.mubr.bf16.mxu0 0
  %686 = vmatmul.mubr.bf16.gmra.mrb[0].mxu0 %v526
  %v687 = vpop.f32.mrb[0].mxu0
  %v688 = vadd.f32 %v556, %v687
  %v689 = vpop.f32.mrb[0].mxu0
  %v690 = vpop.f32.mrb[0].mxu0
  %v691 = vadd.f32 %v556, %v690
  %v692 = vpop.f32.mrb[0].mxu0
  %693 = vmatprep.mubr.bf16.mxu0 0
  %694 = vmatmul.mubr.bf16.gmra.mrb[0].mxu0 %v527
  %v695 = vpop.f32.mrb[0].mxu0
  %v696 = vadd.f32 %v556, %v695
  %v697 = vpop.f32.mrb[0].mxu0
  %v698 = vpop.f32.mrb[0].mxu0
  %v699 = vadd.f32 %v556, %v698
  %v700 = vpop.f32.mrb[0].mxu0
  %701 = vmatprep.mubr.bf16.mxu0 0
  %702 = vmatmul.mubr.bf16.gmra.mrb[0].mxu0 %v528
  %v703 = vpop.f32.mrb[0].mxu0
  %v704 = vadd.f32 %v556, %v703
  %v705 = vpop.f32.mrb[0].mxu0
  %v706 = vpop.f32.mrb[0].mxu0
  %v707 = vadd.f32 %v556, %v706
  %v708 = vpop.f32.mrb[0].mxu0
  %709 = vmatprep.mubr.bf16.mxu0 0
  %710 = vmatmul.mubr.bf16.gmra.mrb[0].mxu0 %v529
  %v711 = vpop.f32.mrb[0].mxu0
  %v712 = vadd.f32 %v556, %v711
  %v713 = vpop.f32.mrb[0].mxu0
  %v714 = vpop.f32.mrb[0].mxu0
  %v715 = vadd.f32 %v556, %v714
  %v716 = vpop.f32.mrb[0].mxu0
  %717 = vmatprep.mubr.bf16.mxu0 0
  %718 = vmatmul.mubr.bf16.gmra.mrb[0].mxu0 %v530
  %v719 = vpop.f32.mrb[0].mxu0
  %v720 = vadd.f32 %v556, %v719
  %v721 = vpop.f32.mrb[0].mxu0
  %v722 = vpop.f32.mrb[0].mxu0
  %v723 = vadd.f32 %v556, %v722
  %v724 = vpop.f32.mrb[0].mxu0
  %725 = vmatprep.mubr.bf16.mxu0 0
  %726 = vmatmul.mubr.bf16.gmra.mrb[0].mxu0 %v531
  %v727 = vpop.f32.mrb[0].mxu0
  %v728 = vadd.f32 %v556, %v727
  %v729 = vpop.f32.mrb[0].mxu0
  %v730 = vpop.f32.mrb[0].mxu0
  %v731 = vadd.f32 %v556, %v730
  %v732 = vpop.f32.mrb[0].mxu0
  %733 = vmatprep.mubr.bf16.mxu0 0
  %734 = vmatmul.mubr.bf16.gmra.mrb[0].mxu0 %v532
  %v735 = vpop.f32.mrb[0].mxu0
  %v736 = vadd.f32 %v556, %v735
  %v737 = vpop.f32.mrb[0].mxu0
  %v738 = vpop.f32.mrb[0].mxu0
  %v739 = vadd.f32 %v556, %v738
  %v740 = vpop.f32.mrb[0].mxu0
  %741 = vmatprep.mubr.bf16.mxu0 0
  %742 = vmatmul.mubr.bf16.gmra.mrb[0].mxu0 %v533
  %v743 = vpop.f32.mrb[0].mxu0
  %v744 = vadd.f32 %v556, %v743
  %v745 = vpop.f32.mrb[0].mxu0
  %v746 = vpop.f32.mrb[0].mxu0
  %v747 = vadd.f32 %v556, %v746
  %v748 = vpop.f32.mrb[0].mxu0
  %749 = vmatprep.mubr.bf16.mxu0 0
  %750 = vmatmul.mubr.bf16.gmra.mrb[0].mxu0 %v534
  %v751 = vpop.f32.mrb[0].mxu0
  %v752 = vadd.f32 %v556, %v751
  %v753 = vpop.f32.mrb[0].mxu0
  %v754 = vpop.f32.mrb[0].mxu0
  %v755 = vadd.f32 %v556, %v754
  %v756 = vpop.f32.mrb[0].mxu0
  %757 = vmatprep.mubr.bf16.mxu0 0
  %758 = vmatmul.mubr.bf16.gmra.mrb[0].mxu0 %v535
  %v759 = vpop.f32.mrb[0].mxu0
  %v760 = vadd.f32 %v556, %v759
  %v761 = vpop.f32.mrb[0].mxu0
  %v762 = vpop.f32.mrb[0].mxu0
  %v763 = vadd.f32 %v556, %v762
  %v764 = vpop.f32.mrb[0].mxu0
  %765 = vdwg.mxu0
  %v766 = vmax.f32 %v640, 0.0
  %v767 = vmax.f32 %v643, 0.0
  %v768 = vmax.f32 %v648, 0.0
  %v769 = vmax.f32 %v651, 0.0
  %v770 = vmax.f32 %v656, 0.0
  %v771 = vmax.f32 %v659, 0.0
  %v772 = vmax.f32 %v664, 0.0
  %v773 = vmax.f32 %v667, 0.0
  %v774 = vmax.f32 %v672, 0.0
  %v775 = vmax.f32 %v675, 0.0
  %v776 = vmax.f32 %v680, 0.0
  %v777 = vmax.f32 %v683, 0.0
  %v778 = vmax.f32 %v688, 0.0
  %v779 = vmax.f32 %v691, 0.0
  %v780 = vmax.f32 %v696, 0.0
  %v781 = vmax.f32 %v699, 0.0
  %v782 = vmax.f32 %v704, 0.0
  %v783 = vmax.f32 %v707, 0.0
  %v784 = vmax.f32 %v712, 0.0
  %v785 = vmax.f32 %v715, 0.0
  %v786 = vmax.f32 %v720, 0.0
  %v787 = vmax.f32 %v723, 0.0
  %v788 = vmax.f32 %v728, 0.0
  %v789 = vmax.f32 %v731, 0.0
  %v790 = vmax.f32 %v736, 0.0
  %v791 = vmax.f32 %v739, 0.0
  %v792 = vmax.f32 %v744, 0.0
  %v793 = vmax.f32 %v747, 0.0
  %v794 = vmax.f32 %v752, 0.0
  %v795 = vmax.f32 %v755, 0.0
  %v796 = vmax.f32 %v760, 0.0
  %v797 = vmax.f32 %v763, 0.0
  %v798 = vpack.c.bf16 %v767, %v766
  %v799 = vpack.c.bf16 %v769, %v768
  %v800 = vpack.c.bf16 %v771, %v770
  %v801 = vpack.c.bf16 %v773, %v772
  %v802 = vpack.c.bf16 %v775, %v774
  %v803 = vpack.c.bf16 %v777, %v776
  %v804 = vpack.c.bf16 %v779, %v778
  %v805 = vpack.c.bf16 %v781, %v780
  %v806 = vpack.c.bf16 %v783, %v782
  %v807 = vpack.c.bf16 %v785, %v784
  %v808 = vpack.c.bf16 %v787, %v786
  %v809 = vpack.c.bf16 %v789, %v788
  %v810 = vpack.c.bf16 %v791, %v790
  %v811 = vpack.c.bf16 %v793, %v792
  %v812 = vpack.c.bf16 %v795, %v794
  %v813 = vpack.c.bf16 %v797, %v796
  %v814 = vld [vmem:[%s3] sm:$0xf]
  %v815 = vld [vmem:[%s3 + $0x4] sm:$0xf]
  %v816 = vld [vmem:[%s3 + $0x8] sm:$0xf]
  %v817 = vld [vmem:[%s3 + $0xc] sm:$0xf]
  %v818 = vld [vmem:[%s3 + $0x10] sm:$0xf]
  %v819 = vld [vmem:[%s3 + $0x14] sm:$0xf]
  %v820 = vld [vmem:[%s3 + $0x18] sm:$0xf]
  %v821 = vld [vmem:[%s3 + $0x1c] sm:$0xf]
  %v822 = vld [vmem:[%s3 + $0x20] sm:$0xf]
  %v823 = vld [vmem:[%s3 + $0x24] sm:$0xf]
  %v824 = vld [vmem:[%s3 + $0x28] sm:$0xf]
  %v825 = vld [vmem:[%s3 + $0x2c] sm:$0xf]
  %v826 = vld [vmem:[%s3 + $0x30] sm:$0xf]
  %v827 = vld [vmem:[%s3 + $0x34] sm:$0xf]
  %v828 = vld [vmem:[%s3 + $0x38] sm:$0xf]
  %v829 = vld [vmem:[%s3 + $0x3c] sm:$0xf]
  %v830 = vld [vmem:[%s1 + $0x3] sm:$0x1]
  %v831 = vlaneseq
  %v832 = vshrl.u32 %v831, 7
  %v833 = vsub.s32 0, %v832
  %v834 = vrot.slane %v830, %v833
  %v851 = vunpack.c.l.b16 %v814
  %v852 = vunpack.c.l.b16 %v815
  %v853 = vunpack.c.l.b16 %v816
  %v854 = vunpack.c.l.b16 %v817
  %v855 = vunpack.c.l.b16 %v818
  %v856 = vunpack.c.l.b16 %v819
  %v857 = vunpack.c.l.b16 %v820
  %v858 = vunpack.c.l.b16 %v821
  %v859 = vunpack.c.l.b16 %v822
  %v860 = vunpack.c.l.b16 %v823
  %v861 = vunpack.c.l.b16 %v824
  %v862 = vunpack.c.l.b16 %v825
  %v863 = vunpack.c.l.b16 %v826
  %v864 = vunpack.c.l.b16 %v827
  %v865 = vunpack.c.l.b16 %v828
  %v866 = vunpack.c.l.b16 %v829
  %v867 = vpack.c.b16 %v852, %v851
  %v868 = vpack.c.b16 %v854, %v853
  %v869 = vpack.c.b16 %v856, %v855
  %v870 = vpack.c.b16 %v858, %v857
  %v871 = vpack.c.b16 %v860, %v859
  %v872 = vpack.c.b16 %v862, %v861
  %v873 = vpack.c.b16 %v864, %v863
  %v874 = vpack.c.b16 %v866, %v865
  %883 = vmatprep.subr.bf16.mxu0 0
  %884 = vmatpush1.bf16.msra.mxu0 %v867
  %885 = vmatprep.subr.bf16.mxu0 0
  %886 = vmatpush1.bf16.msra.mxu0 %v868
  %887 = vmatprep.subr.bf16.mxu0 0
  %888 = vmatpush1.bf16.msra.mxu0 %v869
  %889 = vmatprep.subr.bf16.mxu0 0
  %890 = vmatpush1.bf16.msra.mxu0 %v870
  %891 = vmatprep.subr.bf16.mxu0 0
  %892 = vmatpush1.bf16.msra.mxu0 %v871
  %893 = vmatprep.subr.bf16.mxu0 0
  %894 = vmatpush1.bf16.msra.mxu0 %v872
  %895 = vmatprep.subr.bf16.mxu0 0
  %896 = vmatpush1.bf16.msra.mxu0 %v873
  %897 = vmatprep.subr.bf16.mxu0 0
  %898 = vmatpush1.bf16.msra.mxu0 %v874
  %899 = vmatprep.subr.bf16.mxu0 0
  %900 = vmatpush1.bf16.msra.mxu0 0
  %901 = vmatprep.subr.bf16.mxu0 0
  %902 = vmatpush1.bf16.msra.mxu0 0
  %903 = vmatprep.subr.bf16.mxu0 0
  %904 = vmatpush1.bf16.msra.mxu0 0
  %905 = vmatprep.subr.bf16.mxu0 0
  %906 = vmatpush1.bf16.msra.mxu0 0
  %907 = vmatprep.subr.bf16.mxu0 0
  %908 = vmatpush1.bf16.msra.mxu0 0
  %909 = vmatprep.subr.bf16.mxu0 0
  %910 = vmatpush1.bf16.msra.mxu0 0
  %911 = vmatprep.subr.bf16.mxu0 0
  %912 = vmatpush1.bf16.msra.mxu0 0
  %913 = vmatprep.subr.bf16.mxu0 0
  %914 = vmatpush1.bf16.msra.mxu0 0
  %915 = vmatprep.mubr.bf16.mxu0 0
  %916 = vmatmul.mubr.bf16.gmra.mrb[0].mxu0 %v798
  %v917 = vpop.f32.mrb[0].mxu0
  %v918 = vadd.f32 %v834, %v917
  %v919 = vpop.f32.mrb[0].mxu0
  %v920 = vpop.f32.mrb[0].mxu0
  %v921 = vadd.f32 %v834, %v920
  %v922 = vpop.f32.mrb[0].mxu0
  %923 = vmatprep.mubr.bf16.mxu0 0
  %924 = vmatmul.mubr.bf16.gmra.mrb[0].mxu0 %v799
  %v925 = vpop.f32.mrb[0].mxu0
  %v926 = vadd.f32 %v834, %v925
  %v927 = vpop.f32.mrb[0].mxu0
  %v928 = vpop.f32.mrb[0].mxu0
  %v929 = vadd.f32 %v834, %v928
  %v930 = vpop.f32.mrb[0].mxu0
  %931 = vmatprep.mubr.bf16.mxu0 0
  %932 = vmatmul.mubr.bf16.gmra.mrb[0].mxu0 %v800
  %v933 = vpop.f32.mrb[0].mxu0
  %v934 = vadd.f32 %v834, %v933
  %v935 = vpop.f32.mrb[0].mxu0
  %v936 = vpop.f32.mrb[0].mxu0
  %v937 = vadd.f32 %v834, %v936
  %v938 = vpop.f32.mrb[0].mxu0
  %939 = vmatprep.mubr.bf16.mxu0 0
  %940 = vmatmul.mubr.bf16.gmra.mrb[0].mxu0 %v801
  %v941 = vpop.f32.mrb[0].mxu0
  %v942 = vadd.f32 %v834, %v941
  %v943 = vpop.f32.mrb[0].mxu0
  %v944 = vpop.f32.mrb[0].mxu0
  %v945 = vadd.f32 %v834, %v944
  %v946 = vpop.f32.mrb[0].mxu0
  %947 = vmatprep.mubr.bf16.mxu0 0
  %948 = vmatmul.mubr.bf16.gmra.mrb[0].mxu0 %v802
  %v949 = vpop.f32.mrb[0].mxu0
  %v950 = vadd.f32 %v834, %v949
  %v951 = vpop.f32.mrb[0].mxu0
  %v952 = vpop.f32.mrb[0].mxu0
  %v953 = vadd.f32 %v834, %v952
  %v954 = vpop.f32.mrb[0].mxu0
  %955 = vmatprep.mubr.bf16.mxu0 0
  %956 = vmatmul.mubr.bf16.gmra.mrb[0].mxu0 %v803
  %v957 = vpop.f32.mrb[0].mxu0
  %v958 = vadd.f32 %v834, %v957
  %v959 = vpop.f32.mrb[0].mxu0
  %v960 = vpop.f32.mrb[0].mxu0
  %v961 = vadd.f32 %v834, %v960
  %v962 = vpop.f32.mrb[0].mxu0
  %963 = vmatprep.mubr.bf16.mxu0 0
  %964 = vmatmul.mubr.bf16.gmra.mrb[0].mxu0 %v804
  %v965 = vpop.f32.mrb[0].mxu0
  %v966 = vadd.f32 %v834, %v965
  %v967 = vpop.f32.mrb[0].mxu0
  %v968 = vpop.f32.mrb[0].mxu0
  %v969 = vadd.f32 %v834, %v968
  %v970 = vpop.f32.mrb[0].mxu0
  %971 = vmatprep.mubr.bf16.mxu0 0
  %972 = vmatmul.mubr.bf16.gmra.mrb[0].mxu0 %v805
  %v973 = vpop.f32.mrb[0].mxu0
  %v974 = vadd.f32 %v834, %v973
  %v975 = vpop.f32.mrb[0].mxu0
  %v976 = vpop.f32.mrb[0].mxu0
  %v977 = vadd.f32 %v834, %v976
  %v978 = vpop.f32.mrb[0].mxu0
  %979 = vmatprep.mubr.bf16.mxu0 0
  %980 = vmatmul.mubr.bf16.gmra.mrb[0].mxu0 %v806
  %v981 = vpop.f32.mrb[0].mxu0
  %v982 = vadd.f32 %v834, %v981
  %v983 = vpop.f32.mrb[0].mxu0
  %v984 = vpop.f32.mrb[0].mxu0
  %v985 = vadd.f32 %v834, %v984
  %v986 = vpop.f32.mrb[0].mxu0
  %987 = vmatprep.mubr.bf16.mxu0 0
  %988 = vmatmul.mubr.bf16.gmra.mrb[0].mxu0 %v807
  %v989 = vpop.f32.mrb[0].mxu0
  %v990 = vadd.f32 %v834, %v989
  %v991 = vpop.f32.mrb[0].mxu0
  %v992 = vpop.f32.mrb[0].mxu0
  %v993 = vadd.f32 %v834, %v992
  %v994 = vpop.f32.mrb[0].mxu0
  %995 = vmatprep.mubr.bf16.mxu0 0
  %996 = vmatmul.mubr.bf16.gmra.mrb[0].mxu0 %v808
  %v997 = vpop.f32.mrb[0].mxu0
  %v998 = vadd.f32 %v834, %v997
  %v999 = vpop.f32.mrb[0].mxu0
  %v1000 = vpop.f32.mrb[0].mxu0
  %v1001 = vadd.f32 %v834, %v1000
  %v1002 = vpop.f32.mrb[0].mxu0
  %1003 = vmatprep.mubr.bf16.mxu0 0
  %1004 = vmatmul.mubr.bf16.gmra.mrb[0].mxu0 %v809
  %v1005 = vpop.f32.mrb[0].mxu0
  %v1006 = vadd.f32 %v834, %v1005
  %v1007 = vpop.f32.mrb[0].mxu0
  %v1008 = vpop.f32.mrb[0].mxu0
  %v1009 = vadd.f32 %v834, %v1008
  %v1010 = vpop.f32.mrb[0].mxu0
  %1011 = vmatprep.mubr.bf16.mxu0 0
  %1012 = vmatmul.mubr.bf16.gmra.mrb[0].mxu0 %v810
  %v1013 = vpop.f32.mrb[0].mxu0
  %v1014 = vadd.f32 %v834, %v1013
  %v1015 = vpop.f32.mrb[0].mxu0
  %v1016 = vpop.f32.mrb[0].mxu0
  %v1017 = vadd.f32 %v834, %v1016
  %v1018 = vpop.f32.mrb[0].mxu0
  %1019 = vmatprep.mubr.bf16.mxu0 0
  %1020 = vmatmul.mubr.bf16.gmra.mrb[0].mxu0 %v811
  %v1021 = vpop.f32.mrb[0].mxu0
  %v1022 = vadd.f32 %v834, %v1021
  %v1023 = vpop.f32.mrb[0].mxu0
  %v1024 = vpop.f32.mrb[0].mxu0
  %v1025 = vadd.f32 %v834, %v1024
  %v1026 = vpop.f32.mrb[0].mxu0
  %1027 = vmatprep.mubr.bf16.mxu0 0
  %1028 = vmatmul.mubr.bf16.gmra.mrb[0].mxu0 %v812
  %v1029 = vpop.f32.mrb[0].mxu0
  %v1030 = vadd.f32 %v834, %v1029
  %v1031 = vpop.f32.mrb[0].mxu0
  %v1032 = vpop.f32.mrb[0].mxu0
  %v1033 = vadd.f32 %v834, %v1032
  %v1034 = vpop.f32.mrb[0].mxu0
  %1035 = vmatprep.mubr.bf16.mxu0 0
  %1036 = vmatmul.mubr.bf16.gmra.mrb[0].mxu0 %v813
  %v1037 = vpop.f32.mrb[0].mxu0
  %v1038 = vadd.f32 %v834, %v1037
  %v1039 = vpop.f32.mrb[0].mxu0
  %v1040 = vpop.f32.mrb[0].mxu0
  %v1041 = vadd.f32 %v834, %v1040
  %v1042 = vpop.f32.mrb[0].mxu0
  %1043 = vdwg.mxu0
  %v1044 = vld [vmem:[%s1 + $0x4] sm:$0x1]
  %v1045 = vld [vmem:[%s1 + $0x5] sm:$0x1]
  %1046 = vadd.xlane.f32.xlu0 %v918
  %v1047 = vpop.xlane.xlu0 %1046
  %1048 = vadd.xlane.f32.xlu0 %v921
  %v1049 = vpop.xlane.xlu0 %1048
  %1050 = vadd.xlane.f32.xlu0 %v926
  %v1051 = vpop.xlane.xlu0 %1050
  %1052 = vadd.xlane.f32.xlu0 %v929
  %v1053 = vpop.xlane.xlu0 %1052
  %1054 = vadd.xlane.f32.xlu0 %v934
  %v1055 = vpop.xlane.xlu0 %1054
  %1056 = vadd.xlane.f32.xlu0 %v937
  %v1057 = vpop.xlane.xlu0 %1056
  %1058 = vadd.xlane.f32.xlu0 %v942
  %v1059 = vpop.xlane.xlu0 %1058
  %1060 = vadd.xlane.f32.xlu0 %v945
  %v1061 = vpop.xlane.xlu0 %1060
  %1062 = vadd.xlane.f32.xlu0 %v950
  %v1063 = vpop.xlane.xlu0 %1062
  %1064 = vadd.xlane.f32.xlu0 %v953
  %v1065 = vpop.xlane.xlu0 %1064
  %1066 = vadd.xlane.f32.xlu0 %v958
  %v1067 = vpop.xlane.xlu0 %1066
  %1068 = vadd.xlane.f32.xlu0 %v961
  %v1069 = vpop.xlane.xlu0 %1068
  %1070 = vadd.xlane.f32.xlu0 %v966
  %v1071 = vpop.xlane.xlu0 %1070
  %1072 = vadd.xlane.f32.xlu0 %v969
  %v1073 = vpop.xlane.xlu0 %1072
  %1074 = vadd.xlane.f32.xlu0 %v974
  %v1075 = vpop.xlane.xlu0 %1074
  %1076 = vadd.xlane.f32.xlu0 %v977
  %v1077 = vpop.xlane.xlu0 %1076
  %1078 = vadd.xlane.f32.xlu0 %v982
  %v1079 = vpop.xlane.xlu0 %1078
  %1080 = vadd.xlane.f32.xlu0 %v985
  %v1081 = vpop.xlane.xlu0 %1080
  %1082 = vadd.xlane.f32.xlu0 %v990
  %v1083 = vpop.xlane.xlu0 %1082
  %1084 = vadd.xlane.f32.xlu0 %v993
  %v1085 = vpop.xlane.xlu0 %1084
  %1086 = vadd.xlane.f32.xlu0 %v998
  %v1087 = vpop.xlane.xlu0 %1086
  %1088 = vadd.xlane.f32.xlu0 %v1001
  %v1089 = vpop.xlane.xlu0 %1088
  %1090 = vadd.xlane.f32.xlu0 %v1006
  %v1091 = vpop.xlane.xlu0 %1090
  %1092 = vadd.xlane.f32.xlu0 %v1009
  %v1093 = vpop.xlane.xlu0 %1092
  %1094 = vadd.xlane.f32.xlu0 %v1014
  %v1095 = vpop.xlane.xlu0 %1094
  %1096 = vadd.xlane.f32.xlu0 %v1017
  %v1097 = vpop.xlane.xlu0 %1096
  %1098 = vadd.xlane.f32.xlu0 %v1022
  %v1099 = vpop.xlane.xlu0 %1098
  %1100 = vadd.xlane.f32.xlu0 %v1025
  %v1101 = vpop.xlane.xlu0 %1100
  %1102 = vadd.xlane.f32.xlu0 %v1030
  %v1103 = vpop.xlane.xlu0 %1102
  %1104 = vadd.xlane.f32.xlu0 %v1033
  %v1105 = vpop.xlane.xlu0 %1104
  %1106 = vadd.xlane.f32.xlu0 %v1038
  %v1107 = vpop.xlane.xlu0 %1106
  %1108 = vadd.xlane.f32.xlu0 %v1041
  %v1109 = vpop.xlane.xlu0 %1108
  %v1110 = vmul.f32 %v1047, 0.03125
  %v1111 = vmul.f32 %v1049, 0.03125
  %v1112 = vmul.f32 %v1051, 0.03125
  %v1113 = vmul.f32 %v1053, 0.03125
  %v1114 = vmul.f32 %v1055, 0.03125
  %v1115 = vmul.f32 %v1057, 0.03125
  %v1116 = vmul.f32 %v1059, 0.03125
  %v1117 = vmul.f32 %v1061, 0.03125
  %v1118 = vmul.f32 %v1063, 0.03125
  %v1119 = vmul.f32 %v1065, 0.03125
  %v1120 = vmul.f32 %v1067, 0.03125
  %v1121 = vmul.f32 %v1069, 0.03125
  %v1122 = vmul.f32 %v1071, 0.03125
  %v1123 = vmul.f32 %v1073, 0.03125
  %v1124 = vmul.f32 %v1075, 0.03125
  %v1125 = vmul.f32 %v1077, 0.03125
  %v1126 = vmul.f32 %v1079, 0.03125
  %v1127 = vmul.f32 %v1081, 0.03125
  %v1128 = vmul.f32 %v1083, 0.03125
  %v1129 = vmul.f32 %v1085, 0.03125
  %v1130 = vmul.f32 %v1087, 0.03125
  %v1131 = vmul.f32 %v1089, 0.03125
  %v1132 = vmul.f32 %v1091, 0.03125
  %v1133 = vmul.f32 %v1093, 0.03125
  %v1134 = vmul.f32 %v1095, 0.03125
  %v1135 = vmul.f32 %v1097, 0.03125
  %v1136 = vmul.f32 %v1099, 0.03125
  %v1137 = vmul.f32 %v1101, 0.03125
  %v1138 = vmul.f32 %v1103, 0.03125
  %v1139 = vmul.f32 %v1105, 0.03125
  %v1140 = vmul.f32 %v1107, 0.03125
  %v1141 = vmul.f32 %v1109, 0.03125
  %v1142 = vsub.f32 %v918, %v1110
  %v1143 = vsub.f32 %v921, %v1111
  %v1144 = vsub.f32 %v926, %v1112
  %v1145 = vsub.f32 %v929, %v1113
  %v1146 = vsub.f32 %v934, %v1114
  %v1147 = vsub.f32 %v937, %v1115
  %v1148 = vsub.f32 %v942, %v1116
  %v1149 = vsub.f32 %v945, %v1117
  %v1150 = vsub.f32 %v950, %v1118
  %v1151 = vsub.f32 %v953, %v1119
  %v1152 = vsub.f32 %v958, %v1120
  %v1153 = vsub.f32 %v961, %v1121
  %v1154 = vsub.f32 %v966, %v1122
  %v1155 = vsub.f32 %v969, %v1123
  %v1156 = vsub.f32 %v974, %v1124
  %v1157 = vsub.f32 %v977, %v1125
  %v1158 = vsub.f32 %v982, %v1126
  %v1159 = vsub.f32 %v985, %v1127
  %v1160 = vsub.f32 %v990, %v1128
  %v1161 = vsub.f32 %v993, %v1129
  %v1162 = vsub.f32 %v998, %v1130
  %v1163 = vsub.f32 %v1001, %v1131
  %v1164 = vsub.f32 %v1006, %v1132
  %v1165 = vsub.f32 %v1009, %v1133
  %v1166 = vsub.f32 %v1014, %v1134
  %v1167 = vsub.f32 %v1017, %v1135
  %v1168 = vsub.f32 %v1022, %v1136
  %v1169 = vsub.f32 %v1025, %v1137
  %v1170 = vsub.f32 %v1030, %v1138
  %v1171 = vsub.f32 %v1033, %v1139
  %v1172 = vsub.f32 %v1038, %v1140
  %v1173 = vsub.f32 %v1041, %v1141
  %v1174 = vlaneseq
  %v1175 = vshrl.u32 %v1174, 7
  %v1176 = vsub.s32 0, %v1175
  %v1177 = vrot.slane %v25, %v1176
  %v1178 = vmul.f32 %v1142, %v1177
  %v1179 = vmul.f32 %v1143, %v1177
  %v1180 = vmul.f32 %v1144, %v1177
  %v1181 = vmul.f32 %v1145, %v1177
  %v1182 = vmul.f32 %v1146, %v1177
  %v1183 = vmul.f32 %v1147, %v1177
  %v1184 = vmul.f32 %v1148, %v1177
  %v1185 = vmul.f32 %v1149, %v1177
  %v1186 = vmul.f32 %v1150, %v1177
  %v1187 = vmul.f32 %v1151, %v1177
  %v1188 = vmul.f32 %v1152, %v1177
  %v1189 = vmul.f32 %v1153, %v1177
  %v1190 = vmul.f32 %v1154, %v1177
  %v1191 = vmul.f32 %v1155, %v1177
  %v1192 = vmul.f32 %v1156, %v1177
  %v1193 = vmul.f32 %v1157, %v1177
  %v1194 = vmul.f32 %v1158, %v1177
  %v1195 = vmul.f32 %v1159, %v1177
  %v1196 = vmul.f32 %v1160, %v1177
  %v1197 = vmul.f32 %v1161, %v1177
  %v1198 = vmul.f32 %v1162, %v1177
  %v1199 = vmul.f32 %v1163, %v1177
  %v1200 = vmul.f32 %v1164, %v1177
  %v1201 = vmul.f32 %v1165, %v1177
  %v1202 = vmul.f32 %v1166, %v1177
  %v1203 = vmul.f32 %v1167, %v1177
  %v1204 = vmul.f32 %v1168, %v1177
  %v1205 = vmul.f32 %v1169, %v1177
  %v1206 = vmul.f32 %v1170, %v1177
  %v1207 = vmul.f32 %v1171, %v1177
  %v1208 = vmul.f32 %v1172, %v1177
  %v1209 = vmul.f32 %v1173, %v1177
  %v1210 = vmul.f32 %v1178, %v1178
  %v1211 = vmul.f32 %v1179, %v1179
  %v1212 = vmul.f32 %v1180, %v1180
  %v1213 = vmul.f32 %v1181, %v1181
  %v1214 = vmul.f32 %v1182, %v1182
  %v1215 = vmul.f32 %v1183, %v1183
  %v1216 = vmul.f32 %v1184, %v1184
  %v1217 = vmul.f32 %v1185, %v1185
  %v1218 = vmul.f32 %v1186, %v1186
  %v1219 = vmul.f32 %v1187, %v1187
  %v1220 = vmul.f32 %v1188, %v1188
  %v1221 = vmul.f32 %v1189, %v1189
  %v1222 = vmul.f32 %v1190, %v1190
  %v1223 = vmul.f32 %v1191, %v1191
  %v1224 = vmul.f32 %v1192, %v1192
  %v1225 = vmul.f32 %v1193, %v1193
  %v1226 = vmul.f32 %v1194, %v1194
  %v1227 = vmul.f32 %v1195, %v1195
  %v1228 = vmul.f32 %v1196, %v1196
  %v1229 = vmul.f32 %v1197, %v1197
  %v1230 = vmul.f32 %v1198, %v1198
  %v1231 = vmul.f32 %v1199, %v1199
  %v1232 = vmul.f32 %v1200, %v1200
  %v1233 = vmul.f32 %v1201, %v1201
  %v1234 = vmul.f32 %v1202, %v1202
  %v1235 = vmul.f32 %v1203, %v1203
  %v1236 = vmul.f32 %v1204, %v1204
  %v1237 = vmul.f32 %v1205, %v1205
  %v1238 = vmul.f32 %v1206, %v1206
  %v1239 = vmul.f32 %v1207, %v1207
  %v1240 = vmul.f32 %v1208, %v1208
  %v1241 = vmul.f32 %v1209, %v1209
  %1242 = vadd.xlane.f32.xlu0 %v1210
  %v1243 = vpop.xlane.xlu0 %1242
  %1244 = vadd.xlane.f32.xlu0 %v1211
  %v1245 = vpop.xlane.xlu0 %1244
  %1246 = vadd.xlane.f32.xlu0 %v1212
  %v1247 = vpop.xlane.xlu0 %1246
  %1248 = vadd.xlane.f32.xlu0 %v1213
  %v1249 = vpop.xlane.xlu0 %1248
  %1250 = vadd.xlane.f32.xlu0 %v1214
  %v1251 = vpop.xlane.xlu0 %1250
  %1252 = vadd.xlane.f32.xlu0 %v1215
  %v1253 = vpop.xlane.xlu0 %1252
  %1254 = vadd.xlane.f32.xlu0 %v1216
  %v1255 = vpop.xlane.xlu0 %1254
  %1256 = vadd.xlane.f32.xlu0 %v1217
  %v1257 = vpop.xlane.xlu0 %1256
  %1258 = vadd.xlane.f32.xlu0 %v1218
  %v1259 = vpop.xlane.xlu0 %1258
  %1260 = vadd.xlane.f32.xlu0 %v1219
  %v1261 = vpop.xlane.xlu0 %1260
  %1262 = vadd.xlane.f32.xlu0 %v1220
  %v1263 = vpop.xlane.xlu0 %1262
  %1264 = vadd.xlane.f32.xlu0 %v1221
  %v1265 = vpop.xlane.xlu0 %1264
  %1266 = vadd.xlane.f32.xlu0 %v1222
  %v1267 = vpop.xlane.xlu0 %1266
  %1268 = vadd.xlane.f32.xlu0 %v1223
  %v1269 = vpop.xlane.xlu0 %1268
  %1270 = vadd.xlane.f32.xlu0 %v1224
  %v1271 = vpop.xlane.xlu0 %1270
  %1272 = vadd.xlane.f32.xlu0 %v1225
  %v1273 = vpop.xlane.xlu0 %1272
  %1274 = vadd.xlane.f32.xlu0 %v1226
  %v1275 = vpop.xlane.xlu0 %1274
  %1276 = vadd.xlane.f32.xlu0 %v1227
  %v1277 = vpop.xlane.xlu0 %1276
  %1278 = vadd.xlane.f32.xlu0 %v1228
  %v1279 = vpop.xlane.xlu0 %1278
  %1280 = vadd.xlane.f32.xlu0 %v1229
  %v1281 = vpop.xlane.xlu0 %1280
  %1282 = vadd.xlane.f32.xlu0 %v1230
  %v1283 = vpop.xlane.xlu0 %1282
  %1284 = vadd.xlane.f32.xlu0 %v1231
  %v1285 = vpop.xlane.xlu0 %1284
  %1286 = vadd.xlane.f32.xlu0 %v1232
  %v1287 = vpop.xlane.xlu0 %1286
  %1288 = vadd.xlane.f32.xlu0 %v1233
  %v1289 = vpop.xlane.xlu0 %1288
  %1290 = vadd.xlane.f32.xlu0 %v1234
  %v1291 = vpop.xlane.xlu0 %1290
  %1292 = vadd.xlane.f32.xlu0 %v1235
  %v1293 = vpop.xlane.xlu0 %1292
  %1294 = vadd.xlane.f32.xlu0 %v1236
  %v1295 = vpop.xlane.xlu0 %1294
  %1296 = vadd.xlane.f32.xlu0 %v1237
  %v1297 = vpop.xlane.xlu0 %1296
  %1298 = vadd.xlane.f32.xlu0 %v1238
  %v1299 = vpop.xlane.xlu0 %1298
  %1300 = vadd.xlane.f32.xlu0 %v1239
  %v1301 = vpop.xlane.xlu0 %1300
  %1302 = vadd.xlane.f32.xlu0 %v1240
  %v1303 = vpop.xlane.xlu0 %1302
  %1304 = vadd.xlane.f32.xlu0 %v1241
  %v1305 = vpop.xlane.xlu0 %1304
  %v1306 = vmul.f32 %v1243, 0.03125
  %v1307 = vmul.f32 %v1245, 0.03125
  %v1308 = vmul.f32 %v1247, 0.03125
  %v1309 = vmul.f32 %v1249, 0.03125
  %v1310 = vmul.f32 %v1251, 0.03125
  %v1311 = vmul.f32 %v1253, 0.03125
  %v1312 = vmul.f32 %v1255, 0.03125
  %v1313 = vmul.f32 %v1257, 0.03125
  %v1314 = vmul.f32 %v1259, 0.03125
  %v1315 = vmul.f32 %v1261, 0.03125
  %v1316 = vmul.f32 %v1263, 0.03125
  %v1317 = vmul.f32 %v1265, 0.03125
  %v1318 = vmul.f32 %v1267, 0.03125
  %v1319 = vmul.f32 %v1269, 0.03125
  %v1320 = vmul.f32 %v1271, 0.03125
  %v1321 = vmul.f32 %v1273, 0.03125
  %v1322 = vmul.f32 %v1275, 0.03125
  %v1323 = vmul.f32 %v1277, 0.03125
  %v1324 = vmul.f32 %v1279, 0.03125
  %v1325 = vmul.f32 %v1281, 0.03125
  %v1326 = vmul.f32 %v1283, 0.03125
  %v1327 = vmul.f32 %v1285, 0.03125
  %v1328 = vmul.f32 %v1287, 0.03125
  %v1329 = vmul.f32 %v1289, 0.03125
  %v1330 = vmul.f32 %v1291, 0.03125
  %v1331 = vmul.f32 %v1293, 0.03125
  %v1332 = vmul.f32 %v1295, 0.03125
  %v1333 = vmul.f32 %v1297, 0.03125
  %v1334 = vmul.f32 %v1299, 0.03125
  %v1335 = vmul.f32 %v1301, 0.03125
  %v1336 = vmul.f32 %v1303, 0.03125
  %v1337 = vmul.f32 %v1305, 0.03125
  %v1338 = vadd.f32 %v1306, 1e-05
  %v1339 = vadd.f32 %v1307, 1e-05
  %v1340 = vadd.f32 %v1308, 1e-05
  %v1341 = vadd.f32 %v1309, 1e-05
  %v1342 = vadd.f32 %v1310, 1e-05
  %v1343 = vadd.f32 %v1311, 1e-05
  %v1344 = vadd.f32 %v1312, 1e-05
  %v1345 = vadd.f32 %v1313, 1e-05
  %v1346 = vadd.f32 %v1314, 1e-05
  %v1347 = vadd.f32 %v1315, 1e-05
  %v1348 = vadd.f32 %v1316, 1e-05
  %v1349 = vadd.f32 %v1317, 1e-05
  %v1350 = vadd.f32 %v1318, 1e-05
  %v1351 = vadd.f32 %v1319, 1e-05
  %v1352 = vadd.f32 %v1320, 1e-05
  %v1353 = vadd.f32 %v1321, 1e-05
  %v1354 = vadd.f32 %v1322, 1e-05
  %v1355 = vadd.f32 %v1323, 1e-05
  %v1356 = vadd.f32 %v1324, 1e-05
  %v1357 = vadd.f32 %v1325, 1e-05
  %v1358 = vadd.f32 %v1326, 1e-05
  %v1359 = vadd.f32 %v1327, 1e-05
  %v1360 = vadd.f32 %v1328, 1e-05
  %v1361 = vadd.f32 %v1329, 1e-05
  %v1362 = vadd.f32 %v1330, 1e-05
  %v1363 = vadd.f32 %v1331, 1e-05
  %v1364 = vadd.f32 %v1332, 1e-05
  %v1365 = vadd.f32 %v1333, 1e-05
  %v1366 = vadd.f32 %v1334, 1e-05
  %v1367 = vadd.f32 %v1335, 1e-05
  %v1368 = vadd.f32 %v1336, 1e-05
  %v1369 = vadd.f32 %v1337, 1e-05
  %v1370 = vrsqrt.pop %v1338
  %v1371 = vrsqrt.pop %v1339
  %v1372 = vrsqrt.pop %v1340
  %v1373 = vrsqrt.pop %v1341
  %v1374 = vrsqrt.pop %v1342
  %v1375 = vrsqrt.pop %v1343
  %v1376 = vrsqrt.pop %v1344
  %v1377 = vrsqrt.pop %v1345
  %v1378 = vrsqrt.pop %v1346
  %v1379 = vrsqrt.pop %v1347
  %v1380 = vrsqrt.pop %v1348
  %v1381 = vrsqrt.pop %v1349
  %v1382 = vrsqrt.pop %v1350
  %v1383 = vrsqrt.pop %v1351
  %v1384 = vrsqrt.pop %v1352
  %v1385 = vrsqrt.pop %v1353
  %v1386 = vrsqrt.pop %v1354
  %v1387 = vrsqrt.pop %v1355
  %v1388 = vrsqrt.pop %v1356
  %v1389 = vrsqrt.pop %v1357
  %v1390 = vrsqrt.pop %v1358
  %v1391 = vrsqrt.pop %v1359
  %v1392 = vrsqrt.pop %v1360
  %v1393 = vrsqrt.pop %v1361
  %v1394 = vrsqrt.pop %v1362
  %v1395 = vrsqrt.pop %v1363
  %v1396 = vrsqrt.pop %v1364
  %v1397 = vrsqrt.pop %v1365
  %v1398 = vrsqrt.pop %v1366
  %v1399 = vrsqrt.pop %v1367
  %v1400 = vrsqrt.pop %v1368
  %v1401 = vrsqrt.pop %v1369
  %v1402 = vmul.f32 %v1178, %v1370
  %v1403 = vmul.f32 %v1179, %v1371
  %v1404 = vmul.f32 %v1180, %v1372
  %v1405 = vmul.f32 %v1181, %v1373
  %v1406 = vmul.f32 %v1182, %v1374
  %v1407 = vmul.f32 %v1183, %v1375
  %v1408 = vmul.f32 %v1184, %v1376
  %v1409 = vmul.f32 %v1185, %v1377
  %v1410 = vmul.f32 %v1186, %v1378
  %v1411 = vmul.f32 %v1187, %v1379
  %v1412 = vmul.f32 %v1188, %v1380
  %v1413 = vmul.f32 %v1189, %v1381
  %v1414 = vmul.f32 %v1190, %v1382
  %v1415 = vmul.f32 %v1191, %v1383
  %v1416 = vmul.f32 %v1192, %v1384
  %v1417 = vmul.f32 %v1193, %v1385
  %v1418 = vmul.f32 %v1194, %v1386
  %v1419 = vmul.f32 %v1195, %v1387
  %v1420 = vmul.f32 %v1196, %v1388
  %v1421 = vmul.f32 %v1197, %v1389
  %v1422 = vmul.f32 %v1198, %v1390
  %v1423 = vmul.f32 %v1199, %v1391
  %v1424 = vmul.f32 %v1200, %v1392
  %v1425 = vmul.f32 %v1201, %v1393
  %v1426 = vmul.f32 %v1202, %v1394
  %v1427 = vmul.f32 %v1203, %v1395
  %v1428 = vmul.f32 %v1204, %v1396
  %v1429 = vmul.f32 %v1205, %v1397
  %v1430 = vmul.f32 %v1206, %v1398
  %v1431 = vmul.f32 %v1207, %v1399
  %v1432 = vmul.f32 %v1208, %v1400
  %v1433 = vmul.f32 %v1209, %v1401
  %v1434 = vlaneseq
  %v1435 = vshrl.u32 %v1434, 7
  %v1436 = vsub.s32 0, %v1435
  %v1437 = vrot.slane %v1044, %v1436
  %v1438 = vmul.f32 %v1402, %v1437
  %v1439 = vmul.f32 %v1403, %v1437
  %v1440 = vmul.f32 %v1404, %v1437
  %v1441 = vmul.f32 %v1405, %v1437
  %v1442 = vmul.f32 %v1406, %v1437
  %v1443 = vmul.f32 %v1407, %v1437
  %v1444 = vmul.f32 %v1408, %v1437
  %v1445 = vmul.f32 %v1409, %v1437
  %v1446 = vmul.f32 %v1410, %v1437
  %v1447 = vmul.f32 %v1411, %v1437
  %v1448 = vmul.f32 %v1412, %v1437
  %v1449 = vmul.f32 %v1413, %v1437
  %v1450 = vmul.f32 %v1414, %v1437
  %v1451 = vmul.f32 %v1415, %v1437
  %v1452 = vmul.f32 %v1416, %v1437
  %v1453 = vmul.f32 %v1417, %v1437
  %v1454 = vmul.f32 %v1418, %v1437
  %v1455 = vmul.f32 %v1419, %v1437
  %v1456 = vmul.f32 %v1420, %v1437
  %v1457 = vmul.f32 %v1421, %v1437
  %v1458 = vmul.f32 %v1422, %v1437
  %v1459 = vmul.f32 %v1423, %v1437
  %v1460 = vmul.f32 %v1424, %v1437
  %v1461 = vmul.f32 %v1425, %v1437
  %v1462 = vmul.f32 %v1426, %v1437
  %v1463 = vmul.f32 %v1427, %v1437
  %v1464 = vmul.f32 %v1428, %v1437
  %v1465 = vmul.f32 %v1429, %v1437
  %v1466 = vmul.f32 %v1430, %v1437
  %v1467 = vmul.f32 %v1431, %v1437
  %v1468 = vmul.f32 %v1432, %v1437
  %v1469 = vmul.f32 %v1433, %v1437
  %v1470 = vlaneseq
  %v1471 = vshrl.u32 %v1470, 7
  %v1472 = vsub.s32 0, %v1471
  %v1473 = vrot.slane %v1045, %v1472
  %v1474 = vadd.f32 %v1438, %v1473
  %v1475 = vadd.f32 %v1439, %v1473
  %v1476 = vadd.f32 %v1440, %v1473
  %v1477 = vadd.f32 %v1441, %v1473
  %v1478 = vadd.f32 %v1442, %v1473
  %v1479 = vadd.f32 %v1443, %v1473
  %v1480 = vadd.f32 %v1444, %v1473
  %v1481 = vadd.f32 %v1445, %v1473
  %v1482 = vadd.f32 %v1446, %v1473
  %v1483 = vadd.f32 %v1447, %v1473
  %v1484 = vadd.f32 %v1448, %v1473
  %v1485 = vadd.f32 %v1449, %v1473
  %v1486 = vadd.f32 %v1450, %v1473
  %v1487 = vadd.f32 %v1451, %v1473
  %v1488 = vadd.f32 %v1452, %v1473
  %v1489 = vadd.f32 %v1453, %v1473
  %v1490 = vadd.f32 %v1454, %v1473
  %v1491 = vadd.f32 %v1455, %v1473
  %v1492 = vadd.f32 %v1456, %v1473
  %v1493 = vadd.f32 %v1457, %v1473
  %v1494 = vadd.f32 %v1458, %v1473
  %v1495 = vadd.f32 %v1459, %v1473
  %v1496 = vadd.f32 %v1460, %v1473
  %v1497 = vadd.f32 %v1461, %v1473
  %v1498 = vadd.f32 %v1462, %v1473
  %v1499 = vadd.f32 %v1463, %v1473
  %v1500 = vadd.f32 %v1464, %v1473
  %v1501 = vadd.f32 %v1465, %v1473
  %v1502 = vadd.f32 %v1466, %v1473
  %v1503 = vadd.f32 %v1467, %v1473
  %v1504 = vadd.f32 %v1468, %v1473
  %v1505 = vadd.f32 %v1469, %v1473
  %v1506 = vmax.f32 %v1474, 0.0
  %v1507 = vmax.f32 %v1475, 0.0
  %v1508 = vmax.f32 %v1476, 0.0
  %v1509 = vmax.f32 %v1477, 0.0
  %v1510 = vmax.f32 %v1478, 0.0
  %v1511 = vmax.f32 %v1479, 0.0
  %v1512 = vmax.f32 %v1480, 0.0
  %v1513 = vmax.f32 %v1481, 0.0
  %v1514 = vmax.f32 %v1482, 0.0
  %v1515 = vmax.f32 %v1483, 0.0
  %v1516 = vmax.f32 %v1484, 0.0
  %v1517 = vmax.f32 %v1485, 0.0
  %v1518 = vmax.f32 %v1486, 0.0
  %v1519 = vmax.f32 %v1487, 0.0
  %v1520 = vmax.f32 %v1488, 0.0
  %v1521 = vmax.f32 %v1489, 0.0
  %v1522 = vmax.f32 %v1490, 0.0
  %v1523 = vmax.f32 %v1491, 0.0
  %v1524 = vmax.f32 %v1492, 0.0
  %v1525 = vmax.f32 %v1493, 0.0
  %v1526 = vmax.f32 %v1494, 0.0
  %v1527 = vmax.f32 %v1495, 0.0
  %v1528 = vmax.f32 %v1496, 0.0
  %v1529 = vmax.f32 %v1497, 0.0
  %v1530 = vmax.f32 %v1498, 0.0
  %v1531 = vmax.f32 %v1499, 0.0
  %v1532 = vmax.f32 %v1500, 0.0
  %v1533 = vmax.f32 %v1501, 0.0
  %v1534 = vmax.f32 %v1502, 0.0
  %v1535 = vmax.f32 %v1503, 0.0
  %v1536 = vmax.f32 %v1504, 0.0
  %v1537 = vmax.f32 %v1505, 0.0
  %v1538 = vpack.c.bf16 %v1507, %v1506
  %v1539 = vpack.c.bf16 %v1509, %v1508
  %v1540 = vpack.c.bf16 %v1511, %v1510
  %v1541 = vpack.c.bf16 %v1513, %v1512
  %v1542 = vpack.c.bf16 %v1515, %v1514
  %v1543 = vpack.c.bf16 %v1517, %v1516
  %v1544 = vpack.c.bf16 %v1519, %v1518
  %v1545 = vpack.c.bf16 %v1521, %v1520
  %v1546 = vpack.c.bf16 %v1523, %v1522
  %v1547 = vpack.c.bf16 %v1525, %v1524
  %v1548 = vpack.c.bf16 %v1527, %v1526
  %v1549 = vpack.c.bf16 %v1529, %v1528
  %v1550 = vpack.c.bf16 %v1531, %v1530
  %v1551 = vpack.c.bf16 %v1533, %v1532
  %v1552 = vpack.c.bf16 %v1535, %v1534
  %v1553 = vpack.c.bf16 %v1537, %v1536
  %v1554 = vld [vmem:[%s4] sm:$0xf]
  %v1555 = vld [vmem:[%s4 + $0x4] sm:$0xf]
  %v1556 = vld [vmem:[%s4 + $0x8] sm:$0xf]
  %v1557 = vld [vmem:[%s4 + $0xc] sm:$0xf]
  %v1558 = vld [vmem:[%s4 + $0x10] sm:$0xf]
  %v1559 = vld [vmem:[%s4 + $0x14] sm:$0xf]
  %v1560 = vld [vmem:[%s4 + $0x18] sm:$0xf]
  %v1561 = vld [vmem:[%s4 + $0x1c] sm:$0xf]
  %v1562 = vld [vmem:[%s4 + $0x20] sm:$0xf]
  %v1563 = vld [vmem:[%s4 + $0x24] sm:$0xf]
  %v1564 = vld [vmem:[%s4 + $0x28] sm:$0xf]
  %v1565 = vld [vmem:[%s4 + $0x2c] sm:$0xf]
  %v1566 = vld [vmem:[%s4 + $0x30] sm:$0xf]
  %v1567 = vld [vmem:[%s4 + $0x34] sm:$0xf]
  %v1568 = vld [vmem:[%s4 + $0x38] sm:$0xf]
  %v1569 = vld [vmem:[%s4 + $0x3c] sm:$0xf]
  %v1570 = vld [vmem:[%s1 + $0x6] sm:$0x1]
  %v1571 = vlaneseq
  %v1572 = vshrl.u32 %v1571, 7
  %v1573 = vsub.s32 0, %v1572
  %v1574 = vrot.slane %v1570, %v1573
  %v1591 = vunpack.c.l.b16 %v1554
  %v1592 = vunpack.c.l.b16 %v1555
  %v1593 = vunpack.c.l.b16 %v1556
  %v1594 = vunpack.c.l.b16 %v1557
  %v1595 = vunpack.c.l.b16 %v1558
  %v1596 = vunpack.c.l.b16 %v1559
  %v1597 = vunpack.c.l.b16 %v1560
  %v1598 = vunpack.c.l.b16 %v1561
  %v1599 = vunpack.c.l.b16 %v1562
  %v1600 = vunpack.c.l.b16 %v1563
  %v1601 = vunpack.c.l.b16 %v1564
  %v1602 = vunpack.c.l.b16 %v1565
  %v1603 = vunpack.c.l.b16 %v1566
  %v1604 = vunpack.c.l.b16 %v1567
  %v1605 = vunpack.c.l.b16 %v1568
  %v1606 = vunpack.c.l.b16 %v1569
  %v1607 = vpack.c.b16 %v1592, %v1591
  %v1608 = vpack.c.b16 %v1594, %v1593
  %v1609 = vpack.c.b16 %v1596, %v1595
  %v1610 = vpack.c.b16 %v1598, %v1597
  %v1611 = vpack.c.b16 %v1600, %v1599
  %v1612 = vpack.c.b16 %v1602, %v1601
  %v1613 = vpack.c.b16 %v1604, %v1603
  %v1614 = vpack.c.b16 %v1606, %v1605
  %1623 = vmatprep.subr.bf16.mxu0 0
  %1624 = vmatpush1.bf16.msra.mxu0 %v1607
  %1625 = vmatprep.subr.bf16.mxu0 0
  %1626 = vmatpush1.bf16.msra.mxu0 %v1608
  %1627 = vmatprep.subr.bf16.mxu0 0
  %1628 = vmatpush1.bf16.msra.mxu0 %v1609
  %1629 = vmatprep.subr.bf16.mxu0 0
  %1630 = vmatpush1.bf16.msra.mxu0 %v1610
  %1631 = vmatprep.subr.bf16.mxu0 0
  %1632 = vmatpush1.bf16.msra.mxu0 %v1611
  %1633 = vmatprep.subr.bf16.mxu0 0
  %1634 = vmatpush1.bf16.msra.mxu0 %v1612
  %1635 = vmatprep.subr.bf16.mxu0 0
  %1636 = vmatpush1.bf16.msra.mxu0 %v1613
  %1637 = vmatprep.subr.bf16.mxu0 0
  %1638 = vmatpush1.bf16.msra.mxu0 %v1614
  %1639 = vmatprep.subr.bf16.mxu0 0
  %1640 = vmatpush1.bf16.msra.mxu0 0
  %1641 = vmatprep.subr.bf16.mxu0 0
  %1642 = vmatpush1.bf16.msra.mxu0 0
  %1643 = vmatprep.subr.bf16.mxu0 0
  %1644 = vmatpush1.bf16.msra.mxu0 0
  %1645 = vmatprep.subr.bf16.mxu0 0
  %1646 = vmatpush1.bf16.msra.mxu0 0
  %1647 = vmatprep.subr.bf16.mxu0 0
  %1648 = vmatpush1.bf16.msra.mxu0 0
  %1649 = vmatprep.subr.bf16.mxu0 0
  %1650 = vmatpush1.bf16.msra.mxu0 0
  %1651 = vmatprep.subr.bf16.mxu0 0
  %1652 = vmatpush1.bf16.msra.mxu0 0
  %1653 = vmatprep.subr.bf16.mxu0 0
  %1654 = vmatpush1.bf16.msra.mxu0 0
  %1655 = vmatprep.mubr.bf16.mxu0 0
  %1656 = vmatmul.mubr.bf16.gmra.mrb[0].mxu0 %v1538
  %v1657 = vpop.f32.mrb[0].mxu0
  %v1658 = vadd.f32 %v1574, %v1657
  %v1659 = vpop.f32.mrb[0].mxu0
  %v1660 = vpop.f32.mrb[0].mxu0
  %v1661 = vadd.f32 %v1574, %v1660
  %v1662 = vpop.f32.mrb[0].mxu0
  %1663 = vmatprep.mubr.bf16.mxu0 0
  %1664 = vmatmul.mubr.bf16.gmra.mrb[0].mxu0 %v1539
  %v1665 = vpop.f32.mrb[0].mxu0
  %v1666 = vadd.f32 %v1574, %v1665
  %v1667 = vpop.f32.mrb[0].mxu0
  %v1668 = vpop.f32.mrb[0].mxu0
  %v1669 = vadd.f32 %v1574, %v1668
  %v1670 = vpop.f32.mrb[0].mxu0
  %1671 = vmatprep.mubr.bf16.mxu0 0
  %1672 = vmatmul.mubr.bf16.gmra.mrb[0].mxu0 %v1540
  %v1673 = vpop.f32.mrb[0].mxu0
  %v1674 = vadd.f32 %v1574, %v1673
  %v1675 = vpop.f32.mrb[0].mxu0
  %v1676 = vpop.f32.mrb[0].mxu0
  %v1677 = vadd.f32 %v1574, %v1676
  %v1678 = vpop.f32.mrb[0].mxu0
  %1679 = vmatprep.mubr.bf16.mxu0 0
  %1680 = vmatmul.mubr.bf16.gmra.mrb[0].mxu0 %v1541
  %v1681 = vpop.f32.mrb[0].mxu0
  %v1682 = vadd.f32 %v1574, %v1681
  %v1683 = vpop.f32.mrb[0].mxu0
  %v1684 = vpop.f32.mrb[0].mxu0
  %v1685 = vadd.f32 %v1574, %v1684
  %v1686 = vpop.f32.mrb[0].mxu0
  %1687 = vmatprep.mubr.bf16.mxu0 0
  %1688 = vmatmul.mubr.bf16.gmra.mrb[0].mxu0 %v1542
  %v1689 = vpop.f32.mrb[0].mxu0
  %v1690 = vadd.f32 %v1574, %v1689
  %v1691 = vpop.f32.mrb[0].mxu0
  %v1692 = vpop.f32.mrb[0].mxu0
  %v1693 = vadd.f32 %v1574, %v1692
  %v1694 = vpop.f32.mrb[0].mxu0
  %1695 = vmatprep.mubr.bf16.mxu0 0
  %1696 = vmatmul.mubr.bf16.gmra.mrb[0].mxu0 %v1543
  %v1697 = vpop.f32.mrb[0].mxu0
  %v1698 = vadd.f32 %v1574, %v1697
  %v1699 = vpop.f32.mrb[0].mxu0
  %v1700 = vpop.f32.mrb[0].mxu0
  %v1701 = vadd.f32 %v1574, %v1700
  %v1702 = vpop.f32.mrb[0].mxu0
  %1703 = vmatprep.mubr.bf16.mxu0 0
  %1704 = vmatmul.mubr.bf16.gmra.mrb[0].mxu0 %v1544
  %v1705 = vpop.f32.mrb[0].mxu0
  %v1706 = vadd.f32 %v1574, %v1705
  %v1707 = vpop.f32.mrb[0].mxu0
  %v1708 = vpop.f32.mrb[0].mxu0
  %v1709 = vadd.f32 %v1574, %v1708
  %v1710 = vpop.f32.mrb[0].mxu0
  %1711 = vmatprep.mubr.bf16.mxu0 0
  %1712 = vmatmul.mubr.bf16.gmra.mrb[0].mxu0 %v1545
  %v1713 = vpop.f32.mrb[0].mxu0
  %v1714 = vadd.f32 %v1574, %v1713
  %v1715 = vpop.f32.mrb[0].mxu0
  %v1716 = vpop.f32.mrb[0].mxu0
  %v1717 = vadd.f32 %v1574, %v1716
  %v1718 = vpop.f32.mrb[0].mxu0
  %1719 = vmatprep.mubr.bf16.mxu0 0
  %1720 = vmatmul.mubr.bf16.gmra.mrb[0].mxu0 %v1546
  %v1721 = vpop.f32.mrb[0].mxu0
  %v1722 = vadd.f32 %v1574, %v1721
  %v1723 = vpop.f32.mrb[0].mxu0
  %v1724 = vpop.f32.mrb[0].mxu0
  %v1725 = vadd.f32 %v1574, %v1724
  %v1726 = vpop.f32.mrb[0].mxu0
  %1727 = vmatprep.mubr.bf16.mxu0 0
  %1728 = vmatmul.mubr.bf16.gmra.mrb[0].mxu0 %v1547
  %v1729 = vpop.f32.mrb[0].mxu0
  %v1730 = vadd.f32 %v1574, %v1729
  %v1731 = vpop.f32.mrb[0].mxu0
  %v1732 = vpop.f32.mrb[0].mxu0
  %v1733 = vadd.f32 %v1574, %v1732
  %v1734 = vpop.f32.mrb[0].mxu0
  %1735 = vmatprep.mubr.bf16.mxu0 0
  %1736 = vmatmul.mubr.bf16.gmra.mrb[0].mxu0 %v1548
  %v1737 = vpop.f32.mrb[0].mxu0
  %v1738 = vadd.f32 %v1574, %v1737
  %v1739 = vpop.f32.mrb[0].mxu0
  %v1740 = vpop.f32.mrb[0].mxu0
  %v1741 = vadd.f32 %v1574, %v1740
  %v1742 = vpop.f32.mrb[0].mxu0
  %1743 = vmatprep.mubr.bf16.mxu0 0
  %1744 = vmatmul.mubr.bf16.gmra.mrb[0].mxu0 %v1549
  %v1745 = vpop.f32.mrb[0].mxu0
  %v1746 = vadd.f32 %v1574, %v1745
  %v1747 = vpop.f32.mrb[0].mxu0
  %v1748 = vpop.f32.mrb[0].mxu0
  %v1749 = vadd.f32 %v1574, %v1748
  %v1750 = vpop.f32.mrb[0].mxu0
  %1751 = vmatprep.mubr.bf16.mxu0 0
  %1752 = vmatmul.mubr.bf16.gmra.mrb[0].mxu0 %v1550
  %v1753 = vpop.f32.mrb[0].mxu0
  %v1754 = vadd.f32 %v1574, %v1753
  %v1755 = vpop.f32.mrb[0].mxu0
  %v1756 = vpop.f32.mrb[0].mxu0
  %v1757 = vadd.f32 %v1574, %v1756
  %v1758 = vpop.f32.mrb[0].mxu0
  %1759 = vmatprep.mubr.bf16.mxu0 0
  %1760 = vmatmul.mubr.bf16.gmra.mrb[0].mxu0 %v1551
  %v1761 = vpop.f32.mrb[0].mxu0
  %v1762 = vadd.f32 %v1574, %v1761
  %v1763 = vpop.f32.mrb[0].mxu0
  %v1764 = vpop.f32.mrb[0].mxu0
  %v1765 = vadd.f32 %v1574, %v1764
  %v1766 = vpop.f32.mrb[0].mxu0
  %1767 = vmatprep.mubr.bf16.mxu0 0
  %1768 = vmatmul.mubr.bf16.gmra.mrb[0].mxu0 %v1552
  %v1769 = vpop.f32.mrb[0].mxu0
  %v1770 = vadd.f32 %v1574, %v1769
  %v1771 = vpop.f32.mrb[0].mxu0
  %v1772 = vpop.f32.mrb[0].mxu0
  %v1773 = vadd.f32 %v1574, %v1772
  %v1774 = vpop.f32.mrb[0].mxu0
  %1775 = vmatprep.mubr.bf16.mxu0 0
  %1776 = vmatmul.mubr.bf16.gmra.mrb[0].mxu0 %v1553
  %v1777 = vpop.f32.mrb[0].mxu0
  %v1778 = vadd.f32 %v1574, %v1777
  %v1779 = vpop.f32.mrb[0].mxu0
  %v1780 = vpop.f32.mrb[0].mxu0
  %v1781 = vadd.f32 %v1574, %v1780
  %v1782 = vpop.f32.mrb[0].mxu0
  %1783 = vdwg.mxu0
  %v1784 = vadd.f32 %v1474, %v1658
  %v1785 = vadd.f32 %v1475, %v1661
  %v1786 = vadd.f32 %v1476, %v1666
  %v1787 = vadd.f32 %v1477, %v1669
  %v1788 = vadd.f32 %v1478, %v1674
  %v1789 = vadd.f32 %v1479, %v1677
  %v1790 = vadd.f32 %v1480, %v1682
  %v1791 = vadd.f32 %v1481, %v1685
  %v1792 = vadd.f32 %v1482, %v1690
  %v1793 = vadd.f32 %v1483, %v1693
  %v1794 = vadd.f32 %v1484, %v1698
  %v1795 = vadd.f32 %v1485, %v1701
  %v1796 = vadd.f32 %v1486, %v1706
  %v1797 = vadd.f32 %v1487, %v1709
  %v1798 = vadd.f32 %v1488, %v1714
  %v1799 = vadd.f32 %v1489, %v1717
  %v1800 = vadd.f32 %v1490, %v1722
  %v1801 = vadd.f32 %v1491, %v1725
  %v1802 = vadd.f32 %v1492, %v1730
  %v1803 = vadd.f32 %v1493, %v1733
  %v1804 = vadd.f32 %v1494, %v1738
  %v1805 = vadd.f32 %v1495, %v1741
  %v1806 = vadd.f32 %v1496, %v1746
  %v1807 = vadd.f32 %v1497, %v1749
  %v1808 = vadd.f32 %v1498, %v1754
  %v1809 = vadd.f32 %v1499, %v1757
  %v1810 = vadd.f32 %v1500, %v1762
  %v1811 = vadd.f32 %v1501, %v1765
  %v1812 = vadd.f32 %v1502, %v1770
  %v1813 = vadd.f32 %v1503, %v1773
  %v1814 = vadd.f32 %v1504, %v1778
  %v1815 = vadd.f32 %v1505, %v1781
  %v1816 = vld [vmem:[%s1 + $0x7] sm:$0x1]
  %v1817 = vld [vmem:[%s1 + $0x8] sm:$0x1]
  %1818 = vadd.xlane.f32.xlu0 %v1784
  %v1819 = vpop.xlane.xlu0 %1818
  %1820 = vadd.xlane.f32.xlu0 %v1785
  %v1821 = vpop.xlane.xlu0 %1820
  %1822 = vadd.xlane.f32.xlu0 %v1786
  %v1823 = vpop.xlane.xlu0 %1822
  %1824 = vadd.xlane.f32.xlu0 %v1787
  %v1825 = vpop.xlane.xlu0 %1824
  %1826 = vadd.xlane.f32.xlu0 %v1788
  %v1827 = vpop.xlane.xlu0 %1826
  %1828 = vadd.xlane.f32.xlu0 %v1789
  %v1829 = vpop.xlane.xlu0 %1828
  %1830 = vadd.xlane.f32.xlu0 %v1790
  %v1831 = vpop.xlane.xlu0 %1830
  %1832 = vadd.xlane.f32.xlu0 %v1791
  %v1833 = vpop.xlane.xlu0 %1832
  %1834 = vadd.xlane.f32.xlu0 %v1792
  %v1835 = vpop.xlane.xlu0 %1834
  %1836 = vadd.xlane.f32.xlu0 %v1793
  %v1837 = vpop.xlane.xlu0 %1836
  %1838 = vadd.xlane.f32.xlu0 %v1794
  %v1839 = vpop.xlane.xlu0 %1838
  %1840 = vadd.xlane.f32.xlu0 %v1795
  %v1841 = vpop.xlane.xlu0 %1840
  %1842 = vadd.xlane.f32.xlu0 %v1796
  %v1843 = vpop.xlane.xlu0 %1842
  %1844 = vadd.xlane.f32.xlu0 %v1797
  %v1845 = vpop.xlane.xlu0 %1844
  %1846 = vadd.xlane.f32.xlu0 %v1798
  %v1847 = vpop.xlane.xlu0 %1846
  %1848 = vadd.xlane.f32.xlu0 %v1799
  %v1849 = vpop.xlane.xlu0 %1848
  %1850 = vadd.xlane.f32.xlu0 %v1800
  %v1851 = vpop.xlane.xlu0 %1850
  %1852 = vadd.xlane.f32.xlu0 %v1801
  %v1853 = vpop.xlane.xlu0 %1852
  %1854 = vadd.xlane.f32.xlu0 %v1802
  %v1855 = vpop.xlane.xlu0 %1854
  %1856 = vadd.xlane.f32.xlu0 %v1803
  %v1857 = vpop.xlane.xlu0 %1856
  %1858 = vadd.xlane.f32.xlu0 %v1804
  %v1859 = vpop.xlane.xlu0 %1858
  %1860 = vadd.xlane.f32.xlu0 %v1805
  %v1861 = vpop.xlane.xlu0 %1860
  %1862 = vadd.xlane.f32.xlu0 %v1806
  %v1863 = vpop.xlane.xlu0 %1862
  %1864 = vadd.xlane.f32.xlu0 %v1807
  %v1865 = vpop.xlane.xlu0 %1864
  %1866 = vadd.xlane.f32.xlu0 %v1808
  %v1867 = vpop.xlane.xlu0 %1866
  %1868 = vadd.xlane.f32.xlu0 %v1809
  %v1869 = vpop.xlane.xlu0 %1868
  %1870 = vadd.xlane.f32.xlu0 %v1810
  %v1871 = vpop.xlane.xlu0 %1870
  %1872 = vadd.xlane.f32.xlu0 %v1811
  %v1873 = vpop.xlane.xlu0 %1872
  %1874 = vadd.xlane.f32.xlu0 %v1812
  %v1875 = vpop.xlane.xlu0 %1874
  %1876 = vadd.xlane.f32.xlu0 %v1813
  %v1877 = vpop.xlane.xlu0 %1876
  %1878 = vadd.xlane.f32.xlu0 %v1814
  %v1879 = vpop.xlane.xlu0 %1878
  %1880 = vadd.xlane.f32.xlu0 %v1815
  %v1881 = vpop.xlane.xlu0 %1880
  %v1882 = vmul.f32 %v1819, 0.03125
  %v1883 = vmul.f32 %v1821, 0.03125
  %v1884 = vmul.f32 %v1823, 0.03125
  %v1885 = vmul.f32 %v1825, 0.03125
  %v1886 = vmul.f32 %v1827, 0.03125
  %v1887 = vmul.f32 %v1829, 0.03125
  %v1888 = vmul.f32 %v1831, 0.03125
  %v1889 = vmul.f32 %v1833, 0.03125
  %v1890 = vmul.f32 %v1835, 0.03125
  %v1891 = vmul.f32 %v1837, 0.03125
  %v1892 = vmul.f32 %v1839, 0.03125
  %v1893 = vmul.f32 %v1841, 0.03125
  %v1894 = vmul.f32 %v1843, 0.03125
  %v1895 = vmul.f32 %v1845, 0.03125
  %v1896 = vmul.f32 %v1847, 0.03125
  %v1897 = vmul.f32 %v1849, 0.03125
  %v1898 = vmul.f32 %v1851, 0.03125
  %v1899 = vmul.f32 %v1853, 0.03125
  %v1900 = vmul.f32 %v1855, 0.03125
  %v1901 = vmul.f32 %v1857, 0.03125
  %v1902 = vmul.f32 %v1859, 0.03125
  %v1903 = vmul.f32 %v1861, 0.03125
  %v1904 = vmul.f32 %v1863, 0.03125
  %v1905 = vmul.f32 %v1865, 0.03125
  %v1906 = vmul.f32 %v1867, 0.03125
  %v1907 = vmul.f32 %v1869, 0.03125
  %v1908 = vmul.f32 %v1871, 0.03125
  %v1909 = vmul.f32 %v1873, 0.03125
  %v1910 = vmul.f32 %v1875, 0.03125
  %v1911 = vmul.f32 %v1877, 0.03125
  %v1912 = vmul.f32 %v1879, 0.03125
  %v1913 = vmul.f32 %v1881, 0.03125
  %v1914 = vsub.f32 %v1784, %v1882
  %v1915 = vsub.f32 %v1785, %v1883
  %v1916 = vsub.f32 %v1786, %v1884
  %v1917 = vsub.f32 %v1787, %v1885
  %v1918 = vsub.f32 %v1788, %v1886
  %v1919 = vsub.f32 %v1789, %v1887
  %v1920 = vsub.f32 %v1790, %v1888
  %v1921 = vsub.f32 %v1791, %v1889
  %v1922 = vsub.f32 %v1792, %v1890
  %v1923 = vsub.f32 %v1793, %v1891
  %v1924 = vsub.f32 %v1794, %v1892
  %v1925 = vsub.f32 %v1795, %v1893
  %v1926 = vsub.f32 %v1796, %v1894
  %v1927 = vsub.f32 %v1797, %v1895
  %v1928 = vsub.f32 %v1798, %v1896
  %v1929 = vsub.f32 %v1799, %v1897
  %v1930 = vsub.f32 %v1800, %v1898
  %v1931 = vsub.f32 %v1801, %v1899
  %v1932 = vsub.f32 %v1802, %v1900
  %v1933 = vsub.f32 %v1803, %v1901
  %v1934 = vsub.f32 %v1804, %v1902
  %v1935 = vsub.f32 %v1805, %v1903
  %v1936 = vsub.f32 %v1806, %v1904
  %v1937 = vsub.f32 %v1807, %v1905
  %v1938 = vsub.f32 %v1808, %v1906
  %v1939 = vsub.f32 %v1809, %v1907
  %v1940 = vsub.f32 %v1810, %v1908
  %v1941 = vsub.f32 %v1811, %v1909
  %v1942 = vsub.f32 %v1812, %v1910
  %v1943 = vsub.f32 %v1813, %v1911
  %v1944 = vsub.f32 %v1814, %v1912
  %v1945 = vsub.f32 %v1815, %v1913
  %v1946 = vmul.f32 %v1914, %v1177
  %v1947 = vmul.f32 %v1915, %v1177
  %v1948 = vmul.f32 %v1916, %v1177
  %v1949 = vmul.f32 %v1917, %v1177
  %v1950 = vmul.f32 %v1918, %v1177
  %v1951 = vmul.f32 %v1919, %v1177
  %v1952 = vmul.f32 %v1920, %v1177
  %v1953 = vmul.f32 %v1921, %v1177
  %v1954 = vmul.f32 %v1922, %v1177
  %v1955 = vmul.f32 %v1923, %v1177
  %v1956 = vmul.f32 %v1924, %v1177
  %v1957 = vmul.f32 %v1925, %v1177
  %v1958 = vmul.f32 %v1926, %v1177
  %v1959 = vmul.f32 %v1927, %v1177
  %v1960 = vmul.f32 %v1928, %v1177
  %v1961 = vmul.f32 %v1929, %v1177
  %v1962 = vmul.f32 %v1930, %v1177
  %v1963 = vmul.f32 %v1931, %v1177
  %v1964 = vmul.f32 %v1932, %v1177
  %v1965 = vmul.f32 %v1933, %v1177
  %v1966 = vmul.f32 %v1934, %v1177
  %v1967 = vmul.f32 %v1935, %v1177
  %v1968 = vmul.f32 %v1936, %v1177
  %v1969 = vmul.f32 %v1937, %v1177
  %v1970 = vmul.f32 %v1938, %v1177
  %v1971 = vmul.f32 %v1939, %v1177
  %v1972 = vmul.f32 %v1940, %v1177
  %v1973 = vmul.f32 %v1941, %v1177
  %v1974 = vmul.f32 %v1942, %v1177
  %v1975 = vmul.f32 %v1943, %v1177
  %v1976 = vmul.f32 %v1944, %v1177
  %v1977 = vmul.f32 %v1945, %v1177
  %v1978 = vmul.f32 %v1946, %v1946
  %v1979 = vmul.f32 %v1947, %v1947
  %v1980 = vmul.f32 %v1948, %v1948
  %v1981 = vmul.f32 %v1949, %v1949
  %v1982 = vmul.f32 %v1950, %v1950
  %v1983 = vmul.f32 %v1951, %v1951
  %v1984 = vmul.f32 %v1952, %v1952
  %v1985 = vmul.f32 %v1953, %v1953
  %v1986 = vmul.f32 %v1954, %v1954
  %v1987 = vmul.f32 %v1955, %v1955
  %v1988 = vmul.f32 %v1956, %v1956
  %v1989 = vmul.f32 %v1957, %v1957
  %v1990 = vmul.f32 %v1958, %v1958
  %v1991 = vmul.f32 %v1959, %v1959
  %v1992 = vmul.f32 %v1960, %v1960
  %v1993 = vmul.f32 %v1961, %v1961
  %v1994 = vmul.f32 %v1962, %v1962
  %v1995 = vmul.f32 %v1963, %v1963
  %v1996 = vmul.f32 %v1964, %v1964
  %v1997 = vmul.f32 %v1965, %v1965
  %v1998 = vmul.f32 %v1966, %v1966
  %v1999 = vmul.f32 %v1967, %v1967
  %v2000 = vmul.f32 %v1968, %v1968
  %v2001 = vmul.f32 %v1969, %v1969
  %v2002 = vmul.f32 %v1970, %v1970
  %v2003 = vmul.f32 %v1971, %v1971
  %v2004 = vmul.f32 %v1972, %v1972
  %v2005 = vmul.f32 %v1973, %v1973
  %v2006 = vmul.f32 %v1974, %v1974
  %v2007 = vmul.f32 %v1975, %v1975
  %v2008 = vmul.f32 %v1976, %v1976
  %v2009 = vmul.f32 %v1977, %v1977
  %2010 = vadd.xlane.f32.xlu0 %v1978
  %v2011 = vpop.xlane.xlu0 %2010
  %2012 = vadd.xlane.f32.xlu0 %v1979
  %v2013 = vpop.xlane.xlu0 %2012
  %2014 = vadd.xlane.f32.xlu0 %v1980
  %v2015 = vpop.xlane.xlu0 %2014
  %2016 = vadd.xlane.f32.xlu0 %v1981
  %v2017 = vpop.xlane.xlu0 %2016
  %2018 = vadd.xlane.f32.xlu0 %v1982
  %v2019 = vpop.xlane.xlu0 %2018
  %2020 = vadd.xlane.f32.xlu0 %v1983
  %v2021 = vpop.xlane.xlu0 %2020
  %2022 = vadd.xlane.f32.xlu0 %v1984
  %v2023 = vpop.xlane.xlu0 %2022
  %2024 = vadd.xlane.f32.xlu0 %v1985
  %v2025 = vpop.xlane.xlu0 %2024
  %2026 = vadd.xlane.f32.xlu0 %v1986
  %v2027 = vpop.xlane.xlu0 %2026
  %2028 = vadd.xlane.f32.xlu0 %v1987
  %v2029 = vpop.xlane.xlu0 %2028
  %2030 = vadd.xlane.f32.xlu0 %v1988
  %v2031 = vpop.xlane.xlu0 %2030
  %2032 = vadd.xlane.f32.xlu0 %v1989
  %v2033 = vpop.xlane.xlu0 %2032
  %2034 = vadd.xlane.f32.xlu0 %v1990
  %v2035 = vpop.xlane.xlu0 %2034
  %2036 = vadd.xlane.f32.xlu0 %v1991
  %v2037 = vpop.xlane.xlu0 %2036
  %2038 = vadd.xlane.f32.xlu0 %v1992
  %v2039 = vpop.xlane.xlu0 %2038
  %2040 = vadd.xlane.f32.xlu0 %v1993
  %v2041 = vpop.xlane.xlu0 %2040
  %2042 = vadd.xlane.f32.xlu0 %v1994
  %v2043 = vpop.xlane.xlu0 %2042
  %2044 = vadd.xlane.f32.xlu0 %v1995
  %v2045 = vpop.xlane.xlu0 %2044
  %2046 = vadd.xlane.f32.xlu0 %v1996
  %v2047 = vpop.xlane.xlu0 %2046
  %2048 = vadd.xlane.f32.xlu0 %v1997
  %v2049 = vpop.xlane.xlu0 %2048
  %2050 = vadd.xlane.f32.xlu0 %v1998
  %v2051 = vpop.xlane.xlu0 %2050
  %2052 = vadd.xlane.f32.xlu0 %v1999
  %v2053 = vpop.xlane.xlu0 %2052
  %2054 = vadd.xlane.f32.xlu0 %v2000
  %v2055 = vpop.xlane.xlu0 %2054
  %2056 = vadd.xlane.f32.xlu0 %v2001
  %v2057 = vpop.xlane.xlu0 %2056
  %2058 = vadd.xlane.f32.xlu0 %v2002
  %v2059 = vpop.xlane.xlu0 %2058
  %2060 = vadd.xlane.f32.xlu0 %v2003
  %v2061 = vpop.xlane.xlu0 %2060
  %2062 = vadd.xlane.f32.xlu0 %v2004
  %v2063 = vpop.xlane.xlu0 %2062
  %2064 = vadd.xlane.f32.xlu0 %v2005
  %v2065 = vpop.xlane.xlu0 %2064
  %2066 = vadd.xlane.f32.xlu0 %v2006
  %v2067 = vpop.xlane.xlu0 %2066
  %2068 = vadd.xlane.f32.xlu0 %v2007
  %v2069 = vpop.xlane.xlu0 %2068
  %2070 = vadd.xlane.f32.xlu0 %v2008
  %v2071 = vpop.xlane.xlu0 %2070
  %2072 = vadd.xlane.f32.xlu0 %v2009
  %v2073 = vpop.xlane.xlu0 %2072
  %v2074 = vmul.f32 %v2011, 0.03125
  %v2075 = vmul.f32 %v2013, 0.03125
  %v2076 = vmul.f32 %v2015, 0.03125
  %v2077 = vmul.f32 %v2017, 0.03125
  %v2078 = vmul.f32 %v2019, 0.03125
  %v2079 = vmul.f32 %v2021, 0.03125
  %v2080 = vmul.f32 %v2023, 0.03125
  %v2081 = vmul.f32 %v2025, 0.03125
  %v2082 = vmul.f32 %v2027, 0.03125
  %v2083 = vmul.f32 %v2029, 0.03125
  %v2084 = vmul.f32 %v2031, 0.03125
  %v2085 = vmul.f32 %v2033, 0.03125
  %v2086 = vmul.f32 %v2035, 0.03125
  %v2087 = vmul.f32 %v2037, 0.03125
  %v2088 = vmul.f32 %v2039, 0.03125
  %v2089 = vmul.f32 %v2041, 0.03125
  %v2090 = vmul.f32 %v2043, 0.03125
  %v2091 = vmul.f32 %v2045, 0.03125
  %v2092 = vmul.f32 %v2047, 0.03125
  %v2093 = vmul.f32 %v2049, 0.03125
  %v2094 = vmul.f32 %v2051, 0.03125
  %v2095 = vmul.f32 %v2053, 0.03125
  %v2096 = vmul.f32 %v2055, 0.03125
  %v2097 = vmul.f32 %v2057, 0.03125
  %v2098 = vmul.f32 %v2059, 0.03125
  %v2099 = vmul.f32 %v2061, 0.03125
  %v2100 = vmul.f32 %v2063, 0.03125
  %v2101 = vmul.f32 %v2065, 0.03125
  %v2102 = vmul.f32 %v2067, 0.03125
  %v2103 = vmul.f32 %v2069, 0.03125
  %v2104 = vmul.f32 %v2071, 0.03125
  %v2105 = vmul.f32 %v2073, 0.03125
  %v2106 = vadd.f32 %v2074, 1e-05
  %v2107 = vadd.f32 %v2075, 1e-05
  %v2108 = vadd.f32 %v2076, 1e-05
  %v2109 = vadd.f32 %v2077, 1e-05
  %v2110 = vadd.f32 %v2078, 1e-05
  %v2111 = vadd.f32 %v2079, 1e-05
  %v2112 = vadd.f32 %v2080, 1e-05
  %v2113 = vadd.f32 %v2081, 1e-05
  %v2114 = vadd.f32 %v2082, 1e-05
  %v2115 = vadd.f32 %v2083, 1e-05
  %v2116 = vadd.f32 %v2084, 1e-05
  %v2117 = vadd.f32 %v2085, 1e-05
  %v2118 = vadd.f32 %v2086, 1e-05
  %v2119 = vadd.f32 %v2087, 1e-05
  %v2120 = vadd.f32 %v2088, 1e-05
  %v2121 = vadd.f32 %v2089, 1e-05
  %v2122 = vadd.f32 %v2090, 1e-05
  %v2123 = vadd.f32 %v2091, 1e-05
  %v2124 = vadd.f32 %v2092, 1e-05
  %v2125 = vadd.f32 %v2093, 1e-05
  %v2126 = vadd.f32 %v2094, 1e-05
  %v2127 = vadd.f32 %v2095, 1e-05
  %v2128 = vadd.f32 %v2096, 1e-05
  %v2129 = vadd.f32 %v2097, 1e-05
  %v2130 = vadd.f32 %v2098, 1e-05
  %v2131 = vadd.f32 %v2099, 1e-05
  %v2132 = vadd.f32 %v2100, 1e-05
  %v2133 = vadd.f32 %v2101, 1e-05
  %v2134 = vadd.f32 %v2102, 1e-05
  %v2135 = vadd.f32 %v2103, 1e-05
  %v2136 = vadd.f32 %v2104, 1e-05
  %v2137 = vadd.f32 %v2105, 1e-05
  %v2138 = vrsqrt.pop %v2106
  %v2139 = vrsqrt.pop %v2107
  %v2140 = vrsqrt.pop %v2108
  %v2141 = vrsqrt.pop %v2109
  %v2142 = vrsqrt.pop %v2110
  %v2143 = vrsqrt.pop %v2111
  %v2144 = vrsqrt.pop %v2112
  %v2145 = vrsqrt.pop %v2113
  %v2146 = vrsqrt.pop %v2114
  %v2147 = vrsqrt.pop %v2115
  %v2148 = vrsqrt.pop %v2116
  %v2149 = vrsqrt.pop %v2117
  %v2150 = vrsqrt.pop %v2118
  %v2151 = vrsqrt.pop %v2119
  %v2152 = vrsqrt.pop %v2120
  %v2153 = vrsqrt.pop %v2121
  %v2154 = vrsqrt.pop %v2122
  %v2155 = vrsqrt.pop %v2123
  %v2156 = vrsqrt.pop %v2124
  %v2157 = vrsqrt.pop %v2125
  %v2158 = vrsqrt.pop %v2126
  %v2159 = vrsqrt.pop %v2127
  %v2160 = vrsqrt.pop %v2128
  %v2161 = vrsqrt.pop %v2129
  %v2162 = vrsqrt.pop %v2130
  %v2163 = vrsqrt.pop %v2131
  %v2164 = vrsqrt.pop %v2132
  %v2165 = vrsqrt.pop %v2133
  %v2166 = vrsqrt.pop %v2134
  %v2167 = vrsqrt.pop %v2135
  %v2168 = vrsqrt.pop %v2136
  %v2169 = vrsqrt.pop %v2137
  %v2170 = vmul.f32 %v1946, %v2138
  %v2171 = vmul.f32 %v1947, %v2139
  %v2172 = vmul.f32 %v1948, %v2140
  %v2173 = vmul.f32 %v1949, %v2141
  %v2174 = vmul.f32 %v1950, %v2142
  %v2175 = vmul.f32 %v1951, %v2143
  %v2176 = vmul.f32 %v1952, %v2144
  %v2177 = vmul.f32 %v1953, %v2145
  %v2178 = vmul.f32 %v1954, %v2146
  %v2179 = vmul.f32 %v1955, %v2147
  %v2180 = vmul.f32 %v1956, %v2148
  %v2181 = vmul.f32 %v1957, %v2149
  %v2182 = vmul.f32 %v1958, %v2150
  %v2183 = vmul.f32 %v1959, %v2151
  %v2184 = vmul.f32 %v1960, %v2152
  %v2185 = vmul.f32 %v1961, %v2153
  %v2186 = vmul.f32 %v1962, %v2154
  %v2187 = vmul.f32 %v1963, %v2155
  %v2188 = vmul.f32 %v1964, %v2156
  %v2189 = vmul.f32 %v1965, %v2157
  %v2190 = vmul.f32 %v1966, %v2158
  %v2191 = vmul.f32 %v1967, %v2159
  %v2192 = vmul.f32 %v1968, %v2160
  %v2193 = vmul.f32 %v1969, %v2161
  %v2194 = vmul.f32 %v1970, %v2162
  %v2195 = vmul.f32 %v1971, %v2163
  %v2196 = vmul.f32 %v1972, %v2164
  %v2197 = vmul.f32 %v1973, %v2165
  %v2198 = vmul.f32 %v1974, %v2166
  %v2199 = vmul.f32 %v1975, %v2167
  %v2200 = vmul.f32 %v1976, %v2168
  %v2201 = vmul.f32 %v1977, %v2169
  %v2202 = vlaneseq
  %v2203 = vshrl.u32 %v2202, 7
  %v2204 = vsub.s32 0, %v2203
  %v2205 = vrot.slane %v1816, %v2204
  %v2206 = vmul.f32 %v2170, %v2205
  %v2207 = vmul.f32 %v2171, %v2205
  %v2208 = vmul.f32 %v2172, %v2205
  %v2209 = vmul.f32 %v2173, %v2205
  %v2210 = vmul.f32 %v2174, %v2205
  %v2211 = vmul.f32 %v2175, %v2205
  %v2212 = vmul.f32 %v2176, %v2205
  %v2213 = vmul.f32 %v2177, %v2205
  %v2214 = vmul.f32 %v2178, %v2205
  %v2215 = vmul.f32 %v2179, %v2205
  %v2216 = vmul.f32 %v2180, %v2205
  %v2217 = vmul.f32 %v2181, %v2205
  %v2218 = vmul.f32 %v2182, %v2205
  %v2219 = vmul.f32 %v2183, %v2205
  %v2220 = vmul.f32 %v2184, %v2205
  %v2221 = vmul.f32 %v2185, %v2205
  %v2222 = vmul.f32 %v2186, %v2205
  %v2223 = vmul.f32 %v2187, %v2205
  %v2224 = vmul.f32 %v2188, %v2205
  %v2225 = vmul.f32 %v2189, %v2205
  %v2226 = vmul.f32 %v2190, %v2205
  %v2227 = vmul.f32 %v2191, %v2205
  %v2228 = vmul.f32 %v2192, %v2205
  %v2229 = vmul.f32 %v2193, %v2205
  %v2230 = vmul.f32 %v2194, %v2205
  %v2231 = vmul.f32 %v2195, %v2205
  %v2232 = vmul.f32 %v2196, %v2205
  %v2233 = vmul.f32 %v2197, %v2205
  %v2234 = vmul.f32 %v2198, %v2205
  %v2235 = vmul.f32 %v2199, %v2205
  %v2236 = vmul.f32 %v2200, %v2205
  %v2237 = vmul.f32 %v2201, %v2205
  %v2238 = vlaneseq
  %v2239 = vshrl.u32 %v2238, 7
  %v2240 = vsub.s32 0, %v2239
  %v2241 = vrot.slane %v1817, %v2240
  %v2242 = vadd.f32 %v2206, %v2241
  %v2243 = vadd.f32 %v2207, %v2241
  %v2244 = vadd.f32 %v2208, %v2241
  %v2245 = vadd.f32 %v2209, %v2241
  %v2246 = vadd.f32 %v2210, %v2241
  %v2247 = vadd.f32 %v2211, %v2241
  %v2248 = vadd.f32 %v2212, %v2241
  %v2249 = vadd.f32 %v2213, %v2241
  %v2250 = vadd.f32 %v2214, %v2241
  %v2251 = vadd.f32 %v2215, %v2241
  %v2252 = vadd.f32 %v2216, %v2241
  %v2253 = vadd.f32 %v2217, %v2241
  %v2254 = vadd.f32 %v2218, %v2241
  %v2255 = vadd.f32 %v2219, %v2241
  %v2256 = vadd.f32 %v2220, %v2241
  %v2257 = vadd.f32 %v2221, %v2241
  %v2258 = vadd.f32 %v2222, %v2241
  %v2259 = vadd.f32 %v2223, %v2241
  %v2260 = vadd.f32 %v2224, %v2241
  %v2261 = vadd.f32 %v2225, %v2241
  %v2262 = vadd.f32 %v2226, %v2241
  %v2263 = vadd.f32 %v2227, %v2241
  %v2264 = vadd.f32 %v2228, %v2241
  %v2265 = vadd.f32 %v2229, %v2241
  %v2266 = vadd.f32 %v2230, %v2241
  %v2267 = vadd.f32 %v2231, %v2241
  %v2268 = vadd.f32 %v2232, %v2241
  %v2269 = vadd.f32 %v2233, %v2241
  %v2270 = vadd.f32 %v2234, %v2241
  %v2271 = vadd.f32 %v2235, %v2241
  %v2272 = vadd.f32 %v2236, %v2241
  %v2273 = vadd.f32 %v2237, %v2241
  %v2274 = vmax.f32 %v2242, 0.0
  %v2275 = vmax.f32 %v2243, 0.0
  %v2276 = vmax.f32 %v2244, 0.0
  %v2277 = vmax.f32 %v2245, 0.0
  %v2278 = vmax.f32 %v2246, 0.0
  %v2279 = vmax.f32 %v2247, 0.0
  %v2280 = vmax.f32 %v2248, 0.0
  %v2281 = vmax.f32 %v2249, 0.0
  %v2282 = vmax.f32 %v2250, 0.0
  %v2283 = vmax.f32 %v2251, 0.0
  %v2284 = vmax.f32 %v2252, 0.0
  %v2285 = vmax.f32 %v2253, 0.0
  %v2286 = vmax.f32 %v2254, 0.0
  %v2287 = vmax.f32 %v2255, 0.0
  %v2288 = vmax.f32 %v2256, 0.0
  %v2289 = vmax.f32 %v2257, 0.0
  %v2290 = vmax.f32 %v2258, 0.0
  %v2291 = vmax.f32 %v2259, 0.0
  %v2292 = vmax.f32 %v2260, 0.0
  %v2293 = vmax.f32 %v2261, 0.0
  %v2294 = vmax.f32 %v2262, 0.0
  %v2295 = vmax.f32 %v2263, 0.0
  %v2296 = vmax.f32 %v2264, 0.0
  %v2297 = vmax.f32 %v2265, 0.0
  %v2298 = vmax.f32 %v2266, 0.0
  %v2299 = vmax.f32 %v2267, 0.0
  %v2300 = vmax.f32 %v2268, 0.0
  %v2301 = vmax.f32 %v2269, 0.0
  %v2302 = vmax.f32 %v2270, 0.0
  %v2303 = vmax.f32 %v2271, 0.0
  %v2304 = vmax.f32 %v2272, 0.0
  %v2305 = vmax.f32 %v2273, 0.0
  %v2306 = vpack.c.bf16 %v2275, %v2274
  %v2307 = vpack.c.bf16 %v2277, %v2276
  %v2308 = vpack.c.bf16 %v2279, %v2278
  %v2309 = vpack.c.bf16 %v2281, %v2280
  %v2310 = vpack.c.bf16 %v2283, %v2282
  %v2311 = vpack.c.bf16 %v2285, %v2284
  %v2312 = vpack.c.bf16 %v2287, %v2286
  %v2313 = vpack.c.bf16 %v2289, %v2288
  %v2314 = vpack.c.bf16 %v2291, %v2290
  %v2315 = vpack.c.bf16 %v2293, %v2292
  %v2316 = vpack.c.bf16 %v2295, %v2294
  %v2317 = vpack.c.bf16 %v2297, %v2296
  %v2318 = vpack.c.bf16 %v2299, %v2298
  %v2319 = vpack.c.bf16 %v2301, %v2300
  %v2320 = vpack.c.bf16 %v2303, %v2302
  %v2321 = vpack.c.bf16 %v2305, %v2304
  %v2322 = vld [vmem:[%s5] sm:$0xf]
  %v2323 = vld [vmem:[%s5 + $0x4] sm:$0xf]
  %v2324 = vld [vmem:[%s5 + $0x8] sm:$0xf]
  %v2325 = vld [vmem:[%s5 + $0xc] sm:$0xf]
  %v2326 = vld [vmem:[%s5 + $0x10] sm:$0xf]
  %v2327 = vld [vmem:[%s5 + $0x14] sm:$0xf]
  %v2328 = vld [vmem:[%s5 + $0x18] sm:$0xf]
  %v2329 = vld [vmem:[%s5 + $0x1c] sm:$0xf]
  %v2330 = vld [vmem:[%s5 + $0x20] sm:$0xf]
  %v2331 = vld [vmem:[%s5 + $0x24] sm:$0xf]
  %v2332 = vld [vmem:[%s5 + $0x28] sm:$0xf]
  %v2333 = vld [vmem:[%s5 + $0x2c] sm:$0xf]
  %v2334 = vld [vmem:[%s5 + $0x30] sm:$0xf]
  %v2335 = vld [vmem:[%s5 + $0x34] sm:$0xf]
  %v2336 = vld [vmem:[%s5 + $0x38] sm:$0xf]
  %v2337 = vld [vmem:[%s5 + $0x3c] sm:$0xf]
  %v2338 = vld [vmem:[%s1 + $0x9] sm:$0x1]
  %v2339 = vlaneseq
  %v2340 = vshrl.u32 %v2339, 7
  %v2341 = vsub.s32 0, %v2340
  %v2342 = vrot.slane %v2338, %v2341
  %v2359 = vunpack.c.l.b16 %v2322
  %v2360 = vunpack.c.l.b16 %v2323
  %v2361 = vunpack.c.l.b16 %v2324
  %v2362 = vunpack.c.l.b16 %v2325
  %v2363 = vunpack.c.l.b16 %v2326
  %v2364 = vunpack.c.l.b16 %v2327
  %v2365 = vunpack.c.l.b16 %v2328
  %v2366 = vunpack.c.l.b16 %v2329
  %v2367 = vunpack.c.l.b16 %v2330
  %v2368 = vunpack.c.l.b16 %v2331
  %v2369 = vunpack.c.l.b16 %v2332
  %v2370 = vunpack.c.l.b16 %v2333
  %v2371 = vunpack.c.l.b16 %v2334
  %v2372 = vunpack.c.l.b16 %v2335
  %v2373 = vunpack.c.l.b16 %v2336
  %v2374 = vunpack.c.l.b16 %v2337
  %v2375 = vpack.c.b16 %v2360, %v2359
  %v2376 = vpack.c.b16 %v2362, %v2361
  %v2377 = vpack.c.b16 %v2364, %v2363
  %v2378 = vpack.c.b16 %v2366, %v2365
  %v2379 = vpack.c.b16 %v2368, %v2367
  %v2380 = vpack.c.b16 %v2370, %v2369
  %v2381 = vpack.c.b16 %v2372, %v2371
  %v2382 = vpack.c.b16 %v2374, %v2373
  %2391 = vmatprep.subr.bf16.mxu0 0
  %2392 = vmatpush1.bf16.msra.mxu0 %v2375
  %2393 = vmatprep.subr.bf16.mxu0 0
  %2394 = vmatpush1.bf16.msra.mxu0 %v2376
  %2395 = vmatprep.subr.bf16.mxu0 0
  %2396 = vmatpush1.bf16.msra.mxu0 %v2377
  %2397 = vmatprep.subr.bf16.mxu0 0
  %2398 = vmatpush1.bf16.msra.mxu0 %v2378
  %2399 = vmatprep.subr.bf16.mxu0 0
  %2400 = vmatpush1.bf16.msra.mxu0 %v2379
  %2401 = vmatprep.subr.bf16.mxu0 0
  %2402 = vmatpush1.bf16.msra.mxu0 %v2380
  %2403 = vmatprep.subr.bf16.mxu0 0
  %2404 = vmatpush1.bf16.msra.mxu0 %v2381
  %2405 = vmatprep.subr.bf16.mxu0 0
  %2406 = vmatpush1.bf16.msra.mxu0 %v2382
  %2407 = vmatprep.subr.bf16.mxu0 0
  %2408 = vmatpush1.bf16.msra.mxu0 0
  %2409 = vmatprep.subr.bf16.mxu0 0
  %2410 = vmatpush1.bf16.msra.mxu0 0
  %2411 = vmatprep.subr.bf16.mxu0 0
  %2412 = vmatpush1.bf16.msra.mxu0 0
  %2413 = vmatprep.subr.bf16.mxu0 0
  %2414 = vmatpush1.bf16.msra.mxu0 0
  %2415 = vmatprep.subr.bf16.mxu0 0
  %2416 = vmatpush1.bf16.msra.mxu0 0
  %2417 = vmatprep.subr.bf16.mxu0 0
  %2418 = vmatpush1.bf16.msra.mxu0 0
  %2419 = vmatprep.subr.bf16.mxu0 0
  %2420 = vmatpush1.bf16.msra.mxu0 0
  %2421 = vmatprep.subr.bf16.mxu0 0
  %2422 = vmatpush1.bf16.msra.mxu0 0
  %2423 = vmatprep.mubr.bf16.mxu0 0
  %2424 = vmatmul.mubr.bf16.gmra.mrb[0].mxu0 %v2306
  %v2425 = vpop.f32.mrb[0].mxu0
  %v2426 = vadd.f32 %v2342, %v2425
  %v2427 = vpop.f32.mrb[0].mxu0
  %v2428 = vpop.f32.mrb[0].mxu0
  %v2429 = vadd.f32 %v2342, %v2428
  %v2430 = vpop.f32.mrb[0].mxu0
  %2431 = vmatprep.mubr.bf16.mxu0 0
  %2432 = vmatmul.mubr.bf16.gmra.mrb[0].mxu0 %v2307
  %v2433 = vpop.f32.mrb[0].mxu0
  %v2434 = vadd.f32 %v2342, %v2433
  %v2435 = vpop.f32.mrb[0].mxu0
  %v2436 = vpop.f32.mrb[0].mxu0
  %v2437 = vadd.f32 %v2342, %v2436
  %v2438 = vpop.f32.mrb[0].mxu0
  %2439 = vmatprep.mubr.bf16.mxu0 0
  %2440 = vmatmul.mubr.bf16.gmra.mrb[0].mxu0 %v2308
  %v2441 = vpop.f32.mrb[0].mxu0
  %v2442 = vadd.f32 %v2342, %v2441
  %v2443 = vpop.f32.mrb[0].mxu0
  %v2444 = vpop.f32.mrb[0].mxu0
  %v2445 = vadd.f32 %v2342, %v2444
  %v2446 = vpop.f32.mrb[0].mxu0
  %2447 = vmatprep.mubr.bf16.mxu0 0
  %2448 = vmatmul.mubr.bf16.gmra.mrb[0].mxu0 %v2309
  %v2449 = vpop.f32.mrb[0].mxu0
  %v2450 = vadd.f32 %v2342, %v2449
  %v2451 = vpop.f32.mrb[0].mxu0
  %v2452 = vpop.f32.mrb[0].mxu0
  %v2453 = vadd.f32 %v2342, %v2452
  %v2454 = vpop.f32.mrb[0].mxu0
  %2455 = vmatprep.mubr.bf16.mxu0 0
  %2456 = vmatmul.mubr.bf16.gmra.mrb[0].mxu0 %v2310
  %v2457 = vpop.f32.mrb[0].mxu0
  %v2458 = vadd.f32 %v2342, %v2457
  %v2459 = vpop.f32.mrb[0].mxu0
  %v2460 = vpop.f32.mrb[0].mxu0
  %v2461 = vadd.f32 %v2342, %v2460
  %v2462 = vpop.f32.mrb[0].mxu0
  %2463 = vmatprep.mubr.bf16.mxu0 0
  %2464 = vmatmul.mubr.bf16.gmra.mrb[0].mxu0 %v2311
  %v2465 = vpop.f32.mrb[0].mxu0
  %v2466 = vadd.f32 %v2342, %v2465
  %v2467 = vpop.f32.mrb[0].mxu0
  %v2468 = vpop.f32.mrb[0].mxu0
  %v2469 = vadd.f32 %v2342, %v2468
  %v2470 = vpop.f32.mrb[0].mxu0
  %2471 = vmatprep.mubr.bf16.mxu0 0
  %2472 = vmatmul.mubr.bf16.gmra.mrb[0].mxu0 %v2312
  %v2473 = vpop.f32.mrb[0].mxu0
  %v2474 = vadd.f32 %v2342, %v2473
  %v2475 = vpop.f32.mrb[0].mxu0
  %v2476 = vpop.f32.mrb[0].mxu0
  %v2477 = vadd.f32 %v2342, %v2476
  %v2478 = vpop.f32.mrb[0].mxu0
  %2479 = vmatprep.mubr.bf16.mxu0 0
  %2480 = vmatmul.mubr.bf16.gmra.mrb[0].mxu0 %v2313
  %v2481 = vpop.f32.mrb[0].mxu0
  %v2482 = vadd.f32 %v2342, %v2481
  %v2483 = vpop.f32.mrb[0].mxu0
  %v2484 = vpop.f32.mrb[0].mxu0
  %v2485 = vadd.f32 %v2342, %v2484
  %v2486 = vpop.f32.mrb[0].mxu0
  %2487 = vmatprep.mubr.bf16.mxu0 0
  %2488 = vmatmul.mubr.bf16.gmra.mrb[0].mxu0 %v2314
  %v2489 = vpop.f32.mrb[0].mxu0
  %v2490 = vadd.f32 %v2342, %v2489
  %v2491 = vpop.f32.mrb[0].mxu0
  %v2492 = vpop.f32.mrb[0].mxu0
  %v2493 = vadd.f32 %v2342, %v2492
  %v2494 = vpop.f32.mrb[0].mxu0
  %2495 = vmatprep.mubr.bf16.mxu0 0
  %2496 = vmatmul.mubr.bf16.gmra.mrb[0].mxu0 %v2315
  %v2497 = vpop.f32.mrb[0].mxu0
  %v2498 = vadd.f32 %v2342, %v2497
  %v2499 = vpop.f32.mrb[0].mxu0
  %v2500 = vpop.f32.mrb[0].mxu0
  %v2501 = vadd.f32 %v2342, %v2500
  %v2502 = vpop.f32.mrb[0].mxu0
  %2503 = vmatprep.mubr.bf16.mxu0 0
  %2504 = vmatmul.mubr.bf16.gmra.mrb[0].mxu0 %v2316
  %v2505 = vpop.f32.mrb[0].mxu0
  %v2506 = vadd.f32 %v2342, %v2505
  %v2507 = vpop.f32.mrb[0].mxu0
  %v2508 = vpop.f32.mrb[0].mxu0
  %v2509 = vadd.f32 %v2342, %v2508
  %v2510 = vpop.f32.mrb[0].mxu0
  %2511 = vmatprep.mubr.bf16.mxu0 0
  %2512 = vmatmul.mubr.bf16.gmra.mrb[0].mxu0 %v2317
  %v2513 = vpop.f32.mrb[0].mxu0
  %v2514 = vadd.f32 %v2342, %v2513
  %v2515 = vpop.f32.mrb[0].mxu0
  %v2516 = vpop.f32.mrb[0].mxu0
  %v2517 = vadd.f32 %v2342, %v2516
  %v2518 = vpop.f32.mrb[0].mxu0
  %2519 = vmatprep.mubr.bf16.mxu0 0
  %2520 = vmatmul.mubr.bf16.gmra.mrb[0].mxu0 %v2318
  %v2521 = vpop.f32.mrb[0].mxu0
  %v2522 = vadd.f32 %v2342, %v2521
  %v2523 = vpop.f32.mrb[0].mxu0
  %v2524 = vpop.f32.mrb[0].mxu0
  %v2525 = vadd.f32 %v2342, %v2524
  %v2526 = vpop.f32.mrb[0].mxu0
  %2527 = vmatprep.mubr.bf16.mxu0 0
  %2528 = vmatmul.mubr.bf16.gmra.mrb[0].mxu0 %v2319
  %v2529 = vpop.f32.mrb[0].mxu0
  %v2530 = vadd.f32 %v2342, %v2529
  %v2531 = vpop.f32.mrb[0].mxu0
  %v2532 = vpop.f32.mrb[0].mxu0
  %v2533 = vadd.f32 %v2342, %v2532
  %v2534 = vpop.f32.mrb[0].mxu0
  %2535 = vmatprep.mubr.bf16.mxu0 0
  %2536 = vmatmul.mubr.bf16.gmra.mrb[0].mxu0 %v2320
  %v2537 = vpop.f32.mrb[0].mxu0
  %v2538 = vadd.f32 %v2342, %v2537
  %v2539 = vpop.f32.mrb[0].mxu0
  %v2540 = vpop.f32.mrb[0].mxu0
  %v2541 = vadd.f32 %v2342, %v2540
  %v2542 = vpop.f32.mrb[0].mxu0
  %2543 = vmatprep.mubr.bf16.mxu0 0
  %2544 = vmatmul.mubr.bf16.gmra.mrb[0].mxu0 %v2321
  %v2545 = vpop.f32.mrb[0].mxu0
  %v2546 = vadd.f32 %v2342, %v2545
  %v2547 = vpop.f32.mrb[0].mxu0
  %v2548 = vpop.f32.mrb[0].mxu0
  %v2549 = vadd.f32 %v2342, %v2548
  %v2550 = vpop.f32.mrb[0].mxu0
  %2551 = vdwg.mxu0
  %2552 = vst [vmem:[%s6] sm:$0xff] %v2426
  %2553 = vst [vmem:[%s6 + $0x8] sm:$0xff] %v2429
  %2554 = vst [vmem:[%s6 + $0x10] sm:$0xff] %v2434
  %2555 = vst [vmem:[%s6 + $0x18] sm:$0xff] %v2437
  %2556 = vst [vmem:[%s6 + $0x20] sm:$0xff] %v2442
  %2557 = vst [vmem:[%s6 + $0x28] sm:$0xff] %v2445
  %2558 = vst [vmem:[%s6 + $0x30] sm:$0xff] %v2450
  %2559 = vst [vmem:[%s6 + $0x38] sm:$0xff] %v2453
  %2560 = vst [vmem:[%s6 + $0x40] sm:$0xff] %v2458
  %2561 = vst [vmem:[%s6 + $0x48] sm:$0xff] %v2461
  %2562 = vst [vmem:[%s6 + $0x50] sm:$0xff] %v2466
  %2563 = vst [vmem:[%s6 + $0x58] sm:$0xff] %v2469
  %2564 = vst [vmem:[%s6 + $0x60] sm:$0xff] %v2474
  %2565 = vst [vmem:[%s6 + $0x68] sm:$0xff] %v2477
  %2566 = vst [vmem:[%s6 + $0x70] sm:$0xff] %v2482
  %2567 = vst [vmem:[%s6 + $0x78] sm:$0xff] %v2485
  %2568 = vst [vmem:[%s6 + $0x80] sm:$0xff] %v2490
  %2569 = vst [vmem:[%s6 + $0x88] sm:$0xff] %v2493
  %2570 = vst [vmem:[%s6 + $0x90] sm:$0xff] %v2498
  %2571 = vst [vmem:[%s6 + $0x98] sm:$0xff] %v2501
  %2572 = vst [vmem:[%s6 + $0xa0] sm:$0xff] %v2506
  %2573 = vst [vmem:[%s6 + $0xa8] sm:$0xff] %v2509
  %2574 = vst [vmem:[%s6 + $0xb0] sm:$0xff] %v2514
  %2575 = vst [vmem:[%s6 + $0xb8] sm:$0xff] %v2517
  %2576 = vst [vmem:[%s6 + $0xc0] sm:$0xff] %v2522
  %2577 = vst [vmem:[%s6 + $0xc8] sm:$0xff] %v2525
  %2578 = vst [vmem:[%s6 + $0xd0] sm:$0xff] %v2530
  %2579 = vst [vmem:[%s6 + $0xd8] sm:$0xff] %v2533
  %2580 = vst [vmem:[%s6 + $0xe0] sm:$0xff] %v2538
  %2581 = vst [vmem:[%s6 + $0xe8] sm:$0xff] %v2541
  %2582 = vst [vmem:[%s6 + $0xf0] sm:$0xff] %v2546
  %2583 = vst [vmem:[%s6 + $0xf8] sm:$0xff] %v2549
  // Predicated region
  $region26: #{_mlp_skipper_impl.1} parent=0 // pred_check
    _
  $region27: #{_mlp_skipper_impl.1} parent=0 // pred_check_branch
    %2585 = sbr.rel (0) target = $region29
  $region28: #{_mlp_skipper_impl.1} parent=0 // pred_region
    _
  $region29: #{_mlp_skipper_impl.1} parent=0 // pred_fallthru
    _
  // Predicated region
  $region30: #{_mlp_skipper_impl.1} parent=0 // pred_check
    _
  $region31: #{_mlp_skipper_impl.1} parent=0 // pred_check_branch
    %2587 = sbr.rel (0) target = $region33
  $region32: #{_mlp_skipper_impl.1} parent=0 // pred_region
    _
  $region33: #{_mlp_skipper_impl.1} parent=0 // pred_fallthru
    _

</llo_original>
